<compile_context>
chip_gen: v6e
topology: v6e:2x2x1
jax: 0.10.0
libtpu: 0.0.40
codegen_flags: <defaults>
</compile_context>

<pallas_src>
import functools

import jax
import jax.numpy as jnp
from jax import lax
from jax.experimental import pallas as pl
from jax.experimental.pallas import tpu as pltpu


def _attention_kernel(x_q_ref, x_kv_ref, wq_ref, wk_ref, wv_ref, wo_ref, bo_ref,
                      *refs, scale, heads, dim_head, return_attn):
    if return_attn:
        out_ref, pre_ref, post_ref = refs[:3]
        q_scr, k_scr, v_scr = refs[3:]
    else:
        out_ref = refs[0]
        q_scr, k_scr, v_scr = refs[1:]

    qi = pl.program_id(1)

    # Stage K / V for the whole sequence once per batch element.  Scratch
    # persists across grid steps, and the q-tile axis is "arbitrary"
    # (sequential on one core), so qi == 0 always runs before qi > 0.
    @pl.when(qi == 0)
    def _stage_kv():
        x_kv = x_kv_ref[0]                                         # (N, DIM)
        k = jnp.dot(x_kv, wk_ref[...], preferred_element_type=jnp.float32)
        v = jnp.dot(x_kv, wv_ref[...], preferred_element_type=jnp.float32)
        # TODO(synk): the 64-lane head split below is not 128-lane aligned;
        # it only runs once per batch element (not per tile / per matmul).
        for h in range(heads):
            lo = h * dim_head
            k_scr[h] = k[:, lo:lo + dim_head].astype(k_scr.dtype)
            v_scr[h] = v[:, lo:lo + dim_head].astype(v_scr.dtype)

    # Query tile: one wide fused projection; softmax scale folded into q once.
    x_q = x_q_ref[0]                                               # (TQ, DIM)
    q = jnp.dot(x_q, wq_ref[...], preferred_element_type=jnp.float32) * scale
    for h in range(heads):
        lo = h * dim_head
        q_scr[h] = q[:, lo:lo + dim_head].astype(q_scr.dtype)

    q3 = q_scr[...]                                                # (H, TQ, DH) bf16
    k3 = k_scr[...]                                                # (H, N,  DH) bf16
    v3 = v_scr[...]                                                # (H, N,  DH) bf16

    # scores: einsum('hqd,hkd->hqk') — head-batched, bf16 in, f32 accumulate.
    s = lax.dot_general(q3, k3, (((2,), (2,)), ((0,), (0,))),
                        preferred_element_type=jnp.float32)        # (H, TQ, N)

    if return_attn:
        pre_ref[0] = s.astype(pre_ref.dtype)

    # numerically stable softmax over the key axis
    m = jnp.max(s, axis=-1, keepdims=True)
    p = jnp.exp(s - m)
    attn = p * pl.reciprocal(jnp.sum(p, axis=-1, keepdims=True), approx=True)

    if return_attn:
        post_ref[0] = attn.astype(post_ref.dtype)

    # context: einsum('hqk,hkd->hqd')
    ctx = lax.dot_general(attn.astype(v3.dtype), v3,
                          (((2,), (1,)), ((0,), (0,))),
                          preferred_element_type=jnp.float32)      # (H, TQ, DH)

    # output projection, head-batched: einsum('hqd,hdo->hqo'), then sum heads.
    out_h = lax.dot_general(ctx.astype(wo_ref.dtype), wo_ref[...],
                            (((2,), (1,)), ((0,), (0,))),
                            preferred_element_type=jnp.float32)    # (H, TQ, DIM)
    out = jnp.sum(out_h, axis=0) + bo_ref[...].astype(jnp.float32)
    out_ref[0] = out.astype(out_ref.dtype)


def attention_forward(x, wq, wk, wv, wo, bo, *, heads, dim_head,
                      return_attn=False, q_tile=128,
                      compute_dtype=jnp.bfloat16, attn_dtype=jnp.bfloat16,
                      vmem_limit_bytes=32 * 1024 * 1024):
    """x: (B, N, DIM); wq/wk/wv: (DIM, H*DH); wo: (H*DH, DIM); bo: (1, DIM)."""
    B, N, DIM = x.shape
    inner = heads * dim_head
    assert wq.shape == (DIM, inner) and wk.shape == (DIM, inner)
    assert wv.shape == (DIM, inner)
    assert wo.shape == (inner, DIM) and bo.shape == (1, DIM)
    scale = dim_head ** -0.5

    # Query tile: a multiple of 8 that divides N, else fall back to full N.
    tq = min(q_tile, N)
    if N % tq != 0 or (tq != N and tq % 8 != 0):
        tq = N
    n_q_tiles = N // tq

    wo3 = wo.reshape(heads, dim_head, DIM)   # head-batched output projection

    kernel = functools.partial(
        _attention_kernel, scale=scale, heads=heads, dim_head=dim_head,
        return_attn=return_attn)

    in_specs = [
        pl.BlockSpec((1, tq, DIM), lambda b, i: (b, i, 0)),            # x (q tile)
        pl.BlockSpec((1, N, DIM), lambda b, i: (b, 0, 0)),             # x (k/v, full)
        pl.BlockSpec((DIM, inner), lambda b, i: (0, 0)),               # wq (resident)
        pl.BlockSpec((DIM, inner), lambda b, i: (0, 0)),               # wk
        pl.BlockSpec((DIM, inner), lambda b, i: (0, 0)),               # wv
        pl.BlockSpec((heads, dim_head, DIM), lambda b, i: (0, 0, 0)),  # wo
        pl.BlockSpec((1, DIM), lambda b, i: (0, 0)),                   # bo
    ]

    out_spec_main = pl.BlockSpec((1, tq, DIM), lambda b, i: (b, i, 0))
    out_shape_main = jax.ShapeDtypeStruct((B, N, DIM), x.dtype)

    if return_attn:
        out_shape = (
            out_shape_main,
            jax.ShapeDtypeStruct((B, heads, N, N), attn_dtype),  # pre-softmax
            jax.ShapeDtypeStruct((B, heads, N, N), attn_dtype),  # post-softmax
        )
        out_specs = [
            out_spec_main,
            pl.BlockSpec((1, heads, tq, N), lambda b, i: (b, 0, i, 0)),
            pl.BlockSpec((1, heads, tq, N), lambda b, i: (b, 0, i, 0)),
        ]
    else:
        out_shape = out_shape_main
        out_specs = out_spec_main

    scratch_shapes = [
        pltpu.VMEM((heads, tq, dim_head), compute_dtype),   # q  (per tile)
        pltpu.VMEM((heads, N, dim_head), compute_dtype),    # k  (per batch elem)
        pltpu.VMEM((heads, N, dim_head), compute_dtype),    # v  (per batch elem)
    ]

    return pl.pallas_call(
        kernel,
        out_shape=out_shape,
        grid_spec=pltpu.PrefetchScalarGridSpec(
            num_scalar_prefetch=0,
            grid=(B, n_q_tiles),
            in_specs=in_specs,
            out_specs=out_specs,
            scratch_shapes=scratch_shapes,
        ),
        compiler_params=pltpu.CompilerParams(
            # batch axis sharded across TensorCores; q-tile axis must stay
            # sequential per core because of the K/V staging at qi == 0.
            dimension_semantics=("parallel", "arbitrary"),
            vmem_limit_bytes=vmem_limit_bytes,
        ),
    )(x, x, wq, wk, wv, wo3, bo)


def _reference(x, wq, wk, wv, wo, bo, *, heads, dim_head):
    # plain-JAX f32 reference of the same math, for a sanity check
    B, N, DIM = x.shape
    scale = dim_head ** -0.5

    def split(t):   # (B, N, H*DH) -> (B, H, N, DH)
        return t.reshape(B, N, heads, dim_head).transpose(0, 2, 1, 3)

    q = split(x @ wq)
    k = split(x @ wk)
    v = split(x @ wv)
    dots = jnp.einsum('bhid,bhjd->bhij', q, k) * scale
    attn = jax.nn.softmax(dots, axis=-1)
    out_h = jnp.einsum('bhij,bhjd->bhid', attn, v)
    out = out_h.transpose(0, 2, 1, 3).reshape(B, N, heads * dim_head) @ wo + bo
    return out, dots, attn


if __name__ == "__main__":
    # small, deterministic shapes consistent with the module defaults
    B, N, DIM = 2, 8, 32
    HEADS, DIM_HEAD = 8, 64
    INNER = HEADS * DIM_HEAD

    key = jax.random.PRNGKey(0)
    kx, kq, kk, kv, ko, kb = jax.random.split(key, 6)

    x = jax.random.normal(kx, (B, N, DIM), dtype=jnp.float32)
    # deterministic synthetic parameters (nn.Linear weights, pre-transposed)
    wq = jax.random.normal(kq, (DIM, INNER), dtype=jnp.float32) * 0.05
    wk = jax.random.normal(kk, (DIM, INNER), dtype=jnp.float32) * 0.05
    wv = jax.random.normal(kv, (DIM, INNER), dtype=jnp.float32) * 0.05
    wo = jax.random.normal(ko, (INNER, DIM), dtype=jnp.float32) * 0.05
    bo = jax.random.normal(kb, (1, DIM), dtype=jnp.float32) * 0.05

    # fast path (default): no attention-map writeback
    out = attention_forward(x, wq, wk, wv, wo, bo, heads=HEADS, dim_head=DIM_HEAD)
    jax.block_until_ready(out)

    # intermediates path: bf16 attention maps (module's Intermediates)
    out2, pre_attn, post_attn = attention_forward(
        x, wq, wk, wv, wo, bo, heads=HEADS, dim_head=DIM_HEAD, return_attn=True)
    jax.block_until_ready((out2, pre_attn, post_attn))

    ref_out, ref_pre, ref_post = _reference(
        x, wq, wk, wv, wo, bo, heads=HEADS, dim_head=DIM_HEAD)

    # tolerance accommodates bf16 MXU operands, bf16 attn-map storage and the
    # EUP approximate reciprocal in the softmax denominator
    tol = dict(atol=3e-2, rtol=3e-2)
    assert jnp.allclose(out, ref_out, **tol)
    assert jnp.allclose(out2, ref_out, **tol)
    assert jnp.allclose(pre_attn.astype(jnp.float32), ref_pre, **tol)
    assert jnp.allclose(post_attn.astype(jnp.float32), ref_post, **tol)

    # TODO(synk): optional branches (context/mask/causal/talking_heads/mem_kv/
    # sparse_topk/dropout>0/on_attn/rel_pos/sinusoidal_emb/prev_attn) are not
    # exercised by the default config and are not implemented in the kernel.
    print("KERNEL_OK")
</pallas_src>

<mosaic_0001>
module attributes {stable_mosaic.version = 11 : i64} {
  func.func @_attention_kernel(%arg0: i32, %arg1: i32, %arg2: memref<1x8x32xf32, #tpu.memory_space<vmem>>, %arg3: memref<1x8x32xf32, #tpu.memory_space<vmem>>, %arg4: memref<32x512xf32, #tpu.memory_space<vmem>>, %arg5: memref<32x512xf32, #tpu.memory_space<vmem>>, %arg6: memref<32x512xf32, #tpu.memory_space<vmem>>, %arg7: memref<8x64x32xf32, #tpu.memory_space<vmem>>, %arg8: memref<1x32xf32, #tpu.memory_space<vmem>>, %arg9: memref<1x8x32xf32, #tpu.memory_space<vmem>>, %arg10: memref<8x8x64xbf16, #tpu.memory_space<vmem>>, %arg11: memref<8x8x64xbf16, #tpu.memory_space<vmem>>, %arg12: memref<8x8x64xbf16, #tpu.memory_space<vmem>>) attributes {dimension_semantics = [#tpu.dimension_semantics<parallel>, #tpu.dimension_semantics<arbitrary>], iteration_bounds = array<i64: 2, 1>, scalar_prefetch = 0 : i64, scratch_operands = 3 : i64, tpu.core_type = #tpu.core_type<tc>, window_params = [{transform_indices = @transform_0, window_bounds = array<i64: 1, 8, 32>}, {transform_indices = @transform_1, window_bounds = array<i64: 1, 8, 32>}, {pipeline_mode = #tpu.pipeline_mode<synchronous>, transform_indices = @transform_2, window_bounds = array<i64: 32, 512>}, {pipeline_mode = #tpu.pipeline_mode<synchronous>, transform_indices = @transform_3, window_bounds = array<i64: 32, 512>}, {pipeline_mode = #tpu.pipeline_mode<synchronous>, transform_indices = @transform_4, window_bounds = array<i64: 32, 512>}, {pipeline_mode = #tpu.pipeline_mode<synchronous>, transform_indices = @transform_5, window_bounds = array<i64: 8, 64, 32>}, {pipeline_mode = #tpu.pipeline_mode<synchronous>, transform_indices = @transform_6, window_bounds = array<i64: 1, 32>}, {transform_indices = @transform_7, window_bounds = array<i64: 1, 8, 32>}]} {
    %c0_i32 = arith.constant 0 : i32
    %0 = arith.cmpi eq, %arg1, %c0_i32 : i32
    %1 = arith.extui %0 : i1 to i32
    %c0_i32_0 = arith.constant 0 : i32
    %2 = arith.cmpi ne, %1, %c0_i32_0 : i32
    scf.if %2 {
      %c0_46 = arith.constant 0 : index
      %c0_47 = arith.constant 0 : index
      %c0_48 = arith.constant 0 : index
      %74 = vector.load %arg3[%c0_46, %c0_47, %c0_48] : memref<1x8x32xf32, #tpu.memory_space<vmem>>, vector<1x8x32xf32>
      %75 = vector.shape_cast %74 : vector<1x8x32xf32> to vector<8x32xf32>
      %c0_49 = arith.constant 0 : index
      %c0_50 = arith.constant 0 : index
      %76 = vector.load %arg5[%c0_49, %c0_50] : memref<32x512xf32, #tpu.memory_space<vmem>>, vector<32x512xf32>
      %cst_51 = arith.constant dense<0.000000e+00> : vector<8x512xf32>
      %77 = tpu.matmul %75, %76, %cst_51 {dimension_numbers = #tpu.dot_dimension_numbers<[1], [0], [0], [1], [0, 0, 1, 1], [], []>} : vector<8x32xf32>, vector<32x512xf32>, vector<8x512xf32> -> vector<8x512xf32>
      %c0_52 = arith.constant 0 : index
      %c0_53 = arith.constant 0 : index
      %78 = vector.load %arg6[%c0_52, %c0_53] : memref<32x512xf32, #tpu.memory_space<vmem>>, vector<32x512xf32>
      %cst_54 = arith.constant dense<0.000000e+00> : vector<8x512xf32>
      %79 = tpu.matmul %75, %78, %cst_54 {dimension_numbers = #tpu.dot_dimension_numbers<[1], [0], [0], [1], [0, 0, 1, 1], [], []>} : vector<8x32xf32>, vector<32x512xf32>, vector<8x512xf32> -> vector<8x512xf32>
      %80 = vector.extract_strided_slice %77 {offsets = [0, 0], sizes = [8, 64], strides = [1, 1]} : vector<8x512xf32> to vector<8x64xf32>
      %81 = arith.truncf %80 : vector<8x64xf32> to vector<8x64xbf16>
      %c0_55 = arith.constant 0 : index
      %c0_56 = arith.constant 0 : index
      %c0_57 = arith.constant 0 : index
      %82 = vector.load %arg11[%c0_55, %c0_56, %c0_57] : memref<8x8x64xbf16, #tpu.memory_space<vmem>>, vector<1x8x64xbf16>
      %83 = vector.shape_cast %82 : vector<1x8x64xbf16> to vector<8x64xbf16>
      %84 = vector.shape_cast %81 : vector<8x64xbf16> to vector<1x8x64xbf16>
      tpu.vector_store %arg11[%c0_55, %c0_56, %c0_57], %84 {strides = array<i32>} : memref<8x8x64xbf16, #tpu.memory_space<vmem>>, vector<1x8x64xbf16>,
      %85 = vector.extract_strided_slice %79 {offsets = [0, 0], sizes = [8, 64], strides = [1, 1]} : vector<8x512xf32> to vector<8x64xf32>
      %86 = arith.truncf %85 : vector<8x64xf32> to vector<8x64xbf16>
      %c0_58 = arith.constant 0 : index
      %c0_59 = arith.constant 0 : index
      %c0_60 = arith.constant 0 : index
      %87 = vector.load %arg12[%c0_58, %c0_59, %c0_60] : memref<8x8x64xbf16, #tpu.memory_space<vmem>>, vector<1x8x64xbf16>
      %88 = vector.shape_cast %87 : vector<1x8x64xbf16> to vector<8x64xbf16>
      %89 = vector.shape_cast %86 : vector<8x64xbf16> to vector<1x8x64xbf16>
      tpu.vector_store %arg12[%c0_58, %c0_59, %c0_60], %89 {strides = array<i32>} : memref<8x8x64xbf16, #tpu.memory_space<vmem>>, vector<1x8x64xbf16>,
      %90 = vector.extract_strided_slice %77 {offsets = [0, 64], sizes = [8, 64], strides = [1, 1]} : vector<8x512xf32> to vector<8x64xf32>
      %91 = arith.truncf %90 : vector<8x64xf32> to vector<8x64xbf16>
      %c1_61 = arith.constant 1 : index
      %c0_62 = arith.constant 0 : index
      %c0_63 = arith.constant 0 : index
      %92 = vector.load %arg11[%c1_61, %c0_62, %c0_63] : memref<8x8x64xbf16, #tpu.memory_space<vmem>>, vector<1x8x64xbf16>
      %93 = vector.shape_cast %92 : vector<1x8x64xbf16> to vector<8x64xbf16>
      %94 = vector.shape_cast %91 : vector<8x64xbf16> to vector<1x8x64xbf16>
      tpu.vector_store %arg11[%c1_61, %c0_62, %c0_63], %94 {strides = array<i32>} : memref<8x8x64xbf16, #tpu.memory_space<vmem>>, vector<1x8x64xbf16>,
      %95 = vector.extract_strided_slice %79 {offsets = [0, 64], sizes = [8, 64], strides = [1, 1]} : vector<8x512xf32> to vector<8x64xf32>
      %96 = arith.truncf %95 : vector<8x64xf32> to vector<8x64xbf16>
      %c1_64 = arith.constant 1 : index
      %c0_65 = arith.constant 0 : index
      %c0_66 = arith.constant 0 : index
      %97 = vector.load %arg12[%c1_64, %c0_65, %c0_66] : memref<8x8x64xbf16, #tpu.memory_space<vmem>>, vector<1x8x64xbf16>
      %98 = vector.shape_cast %97 : vector<1x8x64xbf16> to vector<8x64xbf16>
      %99 = vector.shape_cast %96 : vector<8x64xbf16> to vector<1x8x64xbf16>
      tpu.vector_store %arg12[%c1_64, %c0_65, %c0_66], %99 {strides = array<i32>} : memref<8x8x64xbf16, #tpu.memory_space<vmem>>, vector<1x8x64xbf16>,
      %100 = vector.extract_strided_slice %77 {offsets = [0, 128], sizes = [8, 64], strides = [1, 1]} : vector<8x512xf32> to vector<8x64xf32>
      %101 = arith.truncf %100 : vector<8x64xf32> to vector<8x64xbf16>
      %c2_67 = arith.constant 2 : index
      %c0_68 = arith.constant 0 : index
      %c0_69 = arith.constant 0 : index
      %102 = vector.load %arg11[%c2_67, %c0_68, %c0_69] : memref<8x8x64xbf16, #tpu.memory_space<vmem>>, vector<1x8x64xbf16>
      %103 = vector.shape_cast %102 : vector<1x8x64xbf16> to vector<8x64xbf16>
      %104 = vector.shape_cast %101 : vector<8x64xbf16> to vector<1x8x64xbf16>
      tpu.vector_store %arg11[%c2_67, %c0_68, %c0_69], %104 {strides = array<i32>} : memref<8x8x64xbf16, #tpu.memory_space<vmem>>, vector<1x8x64xbf16>,
      %105 = vector.extract_strided_slice %79 {offsets = [0, 128], sizes = [8, 64], strides = [1, 1]} : vector<8x512xf32> to vector<8x64xf32>
      %106 = arith.truncf %105 : vector<8x64xf32> to vector<8x64xbf16>
      %c2_70 = arith.constant 2 : index
      %c0_71 = arith.constant 0 : index
      %c0_72 = arith.constant 0 : index
      %107 = vector.load %arg12[%c2_70, %c0_71, %c0_72] : memref<8x8x64xbf16, #tpu.memory_space<vmem>>, vector<1x8x64xbf16>
      %108 = vector.shape_cast %107 : vector<1x8x64xbf16> to vector<8x64xbf16>
      %109 = vector.shape_cast %106 : vector<8x64xbf16> to vector<1x8x64xbf16>
      tpu.vector_store %arg12[%c2_70, %c0_71, %c0_72], %109 {strides = array<i32>} : memref<8x8x64xbf16, #tpu.memory_space<vmem>>, vector<1x8x64xbf16>,
      %110 = vector.extract_strided_slice %77 {offsets = [0, 192], sizes = [8, 64], strides = [1, 1]} : vector<8x512xf32> to vector<8x64xf32>
      %111 = arith.truncf %110 : vector<8x64xf32> to vector<8x64xbf16>
      %c3_73 = arith.constant 3 : index
      %c0_74 = arith.constant 0 : index
      %c0_75 = arith.constant 0 : index
      %112 = vector.load %arg11[%c3_73, %c0_74, %c0_75] : memref<8x8x64xbf16, #tpu.memory_space<vmem>>, vector<1x8x64xbf16>
      %113 = vector.shape_cast %112 : vector<1x8x64xbf16> to vector<8x64xbf16>
      %114 = vector.shape_cast %111 : vector<8x64xbf16> to vector<1x8x64xbf16>
      tpu.vector_store %arg11[%c3_73, %c0_74, %c0_75], %114 {strides = array<i32>} : memref<8x8x64xbf16, #tpu.memory_space<vmem>>, vector<1x8x64xbf16>,
      %115 = vector.extract_strided_slice %79 {offsets = [0, 192], sizes = [8, 64], strides = [1, 1]} : vector<8x512xf32> to vector<8x64xf32>
      %116 = arith.truncf %115 : vector<8x64xf32> to vector<8x64xbf16>
      %c3_76 = arith.constant 3 : index
      %c0_77 = arith.constant 0 : index
      %c0_78 = arith.constant 0 : index
      %117 = vector.load %arg12[%c3_76, %c0_77, %c0_78] : memref<8x8x64xbf16, #tpu.memory_space<vmem>>, vector<1x8x64xbf16>
      %118 = vector.shape_cast %117 : vector<1x8x64xbf16> to vector<8x64xbf16>
      %119 = vector.shape_cast %116 : vector<8x64xbf16> to vector<1x8x64xbf16>
      tpu.vector_store %arg12[%c3_76, %c0_77, %c0_78], %119 {strides = array<i32>} : memref<8x8x64xbf16, #tpu.memory_space<vmem>>, vector<1x8x64xbf16>,
      %120 = vector.extract_strided_slice %77 {offsets = [0, 256], sizes = [8, 64], strides = [1, 1]} : vector<8x512xf32> to vector<8x64xf32>
      %121 = arith.truncf %120 : vector<8x64xf32> to vector<8x64xbf16>
      %c4_79 = arith.constant 4 : index
      %c0_80 = arith.constant 0 : index
      %c0_81 = arith.constant 0 : index
      %122 = vector.load %arg11[%c4_79, %c0_80, %c0_81] : memref<8x8x64xbf16, #tpu.memory_space<vmem>>, vector<1x8x64xbf16>
      %123 = vector.shape_cast %122 : vector<1x8x64xbf16> to vector<8x64xbf16>
      %124 = vector.shape_cast %121 : vector<8x64xbf16> to vector<1x8x64xbf16>
      tpu.vector_store %arg11[%c4_79, %c0_80, %c0_81], %124 {strides = array<i32>} : memref<8x8x64xbf16, #tpu.memory_space<vmem>>, vector<1x8x64xbf16>,
      %125 = vector.extract_strided_slice %79 {offsets = [0, 256], sizes = [8, 64], strides = [1, 1]} : vector<8x512xf32> to vector<8x64xf32>
      %126 = arith.truncf %125 : vector<8x64xf32> to vector<8x64xbf16>
      %c4_82 = arith.constant 4 : index
      %c0_83 = arith.constant 0 : index
      %c0_84 = arith.constant 0 : index
      %127 = vector.load %arg12[%c4_82, %c0_83, %c0_84] : memref<8x8x64xbf16, #tpu.memory_space<vmem>>, vector<1x8x64xbf16>
      %128 = vector.shape_cast %127 : vector<1x8x64xbf16> to vector<8x64xbf16>
      %129 = vector.shape_cast %126 : vector<8x64xbf16> to vector<1x8x64xbf16>
      tpu.vector_store %arg12[%c4_82, %c0_83, %c0_84], %129 {strides = array<i32>} : memref<8x8x64xbf16, #tpu.memory_space<vmem>>, vector<1x8x64xbf16>,
      %130 = vector.extract_strided_slice %77 {offsets = [0, 320], sizes = [8, 64], strides = [1, 1]} : vector<8x512xf32> to vector<8x64xf32>
      %131 = arith.truncf %130 : vector<8x64xf32> to vector<8x64xbf16>
      %c5_85 = arith.constant 5 : index
      %c0_86 = arith.constant 0 : index
      %c0_87 = arith.constant 0 : index
      %132 = vector.load %arg11[%c5_85, %c0_86, %c0_87] : memref<8x8x64xbf16, #tpu.memory_space<vmem>>, vector<1x8x64xbf16>
      %133 = vector.shape_cast %132 : vector<1x8x64xbf16> to vector<8x64xbf16>
      %134 = vector.shape_cast %131 : vector<8x64xbf16> to vector<1x8x64xbf16>
      tpu.vector_store %arg11[%c5_85, %c0_86, %c0_87], %134 {strides = array<i32>} : memref<8x8x64xbf16, #tpu.memory_space<vmem>>, vector<1x8x64xbf16>,
      %135 = vector.extract_strided_slice %79 {offsets = [0, 320], sizes = [8, 64], strides = [1, 1]} : vector<8x512xf32> to vector<8x64xf32>
      %136 = arith.truncf %135 : vector<8x64xf32> to vector<8x64xbf16>
      %c5_88 = arith.constant 5 : index
      %c0_89 = arith.constant 0 : index
      %c0_90 = arith.constant 0 : index
      %137 = vector.load %arg12[%c5_88, %c0_89, %c0_90] : memref<8x8x64xbf16, #tpu.memory_space<vmem>>, vector<1x8x64xbf16>
      %138 = vector.shape_cast %137 : vector<1x8x64xbf16> to vector<8x64xbf16>
      %139 = vector.shape_cast %136 : vector<8x64xbf16> to vector<1x8x64xbf16>
      tpu.vector_store %arg12[%c5_88, %c0_89, %c0_90], %139 {strides = array<i32>} : memref<8x8x64xbf16, #tpu.memory_space<vmem>>, vector<1x8x64xbf16>,
      %140 = vector.extract_strided_slice %77 {offsets = [0, 384], sizes = [8, 64], strides = [1, 1]} : vector<8x512xf32> to vector<8x64xf32>
      %141 = arith.truncf %140 : vector<8x64xf32> to vector<8x64xbf16>
      %c6_91 = arith.constant 6 : index
      %c0_92 = arith.constant 0 : index
      %c0_93 = arith.constant 0 : index
      %142 = vector.load %arg11[%c6_91, %c0_92, %c0_93] : memref<8x8x64xbf16, #tpu.memory_space<vmem>>, vector<1x8x64xbf16>
      %143 = vector.shape_cast %142 : vector<1x8x64xbf16> to vector<8x64xbf16>
      %144 = vector.shape_cast %141 : vector<8x64xbf16> to vector<1x8x64xbf16>
      tpu.vector_store %arg11[%c6_91, %c0_92, %c0_93], %144 {strides = array<i32>} : memref<8x8x64xbf16, #tpu.memory_space<vmem>>, vector<1x8x64xbf16>,
      %145 = vector.extract_strided_slice %79 {offsets = [0, 384], sizes = [8, 64], strides = [1, 1]} : vector<8x512xf32> to vector<8x64xf32>
      %146 = arith.truncf %145 : vector<8x64xf32> to vector<8x64xbf16>
      %c6_94 = arith.constant 6 : index
      %c0_95 = arith.constant 0 : index
      %c0_96 = arith.constant 0 : index
      %147 = vector.load %arg12[%c6_94, %c0_95, %c0_96] : memref<8x8x64xbf16, #tpu.memory_space<vmem>>, vector<1x8x64xbf16>
      %148 = vector.shape_cast %147 : vector<1x8x64xbf16> to vector<8x64xbf16>
      %149 = vector.shape_cast %146 : vector<8x64xbf16> to vector<1x8x64xbf16>
      tpu.vector_store %arg12[%c6_94, %c0_95, %c0_96], %149 {strides = array<i32>} : memref<8x8x64xbf16, #tpu.memory_space<vmem>>, vector<1x8x64xbf16>,
      %150 = vector.extract_strided_slice %77 {offsets = [0, 448], sizes = [8, 64], strides = [1, 1]} : vector<8x512xf32> to vector<8x64xf32>
      %151 = arith.truncf %150 : vector<8x64xf32> to vector<8x64xbf16>
      %c7_97 = arith.constant 7 : index
      %c0_98 = arith.constant 0 : index
      %c0_99 = arith.constant 0 : index
      %152 = vector.load %arg11[%c7_97, %c0_98, %c0_99] : memref<8x8x64xbf16, #tpu.memory_space<vmem>>, vector<1x8x64xbf16>
      %153 = vector.shape_cast %152 : vector<1x8x64xbf16> to vector<8x64xbf16>
      %154 = vector.shape_cast %151 : vector<8x64xbf16> to vector<1x8x64xbf16>
      tpu.vector_store %arg11[%c7_97, %c0_98, %c0_99], %154 {strides = array<i32>} : memref<8x8x64xbf16, #tpu.memory_space<vmem>>, vector<1x8x64xbf16>,
      %155 = vector.extract_strided_slice %79 {offsets = [0, 448], sizes = [8, 64], strides = [1, 1]} : vector<8x512xf32> to vector<8x64xf32>
      %156 = arith.truncf %155 : vector<8x64xf32> to vector<8x64xbf16>
      %c7_100 = arith.constant 7 : index
      %c0_101 = arith.constant 0 : index
      %c0_102 = arith.constant 0 : index
      %157 = vector.load %arg12[%c7_100, %c0_101, %c0_102] : memref<8x8x64xbf16, #tpu.memory_space<vmem>>, vector<1x8x64xbf16>
      %158 = vector.shape_cast %157 : vector<1x8x64xbf16> to vector<8x64xbf16>
      %159 = vector.shape_cast %156 : vector<8x64xbf16> to vector<1x8x64xbf16>
      tpu.vector_store %arg12[%c7_100, %c0_101, %c0_102], %159 {strides = array<i32>} : memref<8x8x64xbf16, #tpu.memory_space<vmem>>, vector<1x8x64xbf16>,
    } else {
    }
    %c0 = arith.constant 0 : index
    %c0_1 = arith.constant 0 : index
    %c0_2 = arith.constant 0 : index
    %3 = vector.load %arg2[%c0, %c0_1, %c0_2] : memref<1x8x32xf32, #tpu.memory_space<vmem>>, vector<1x8x32xf32>
    %4 = vector.shape_cast %3 : vector<1x8x32xf32> to vector<8x32xf32>
    %c0_3 = arith.constant 0 : index
    %c0_4 = arith.constant 0 : index
    %5 = vector.load %arg4[%c0_3, %c0_4] : memref<32x512xf32, #tpu.memory_space<vmem>>, vector<32x512xf32>
    %cst = arith.constant dense<0.000000e+00> : vector<8x512xf32>
    %6 = tpu.matmul %4, %5, %cst {dimension_numbers = #tpu.dot_dimension_numbers<[1], [0], [0], [1], [0, 0, 1, 1], [], []>} : vector<8x32xf32>, vector<32x512xf32>, vector<8x512xf32> -> vector<8x512xf32>
    %cst_5 = arith.constant 1.250000e-01 : f32
    %7 = vector.broadcast %cst_5 : f32 to vector<8x512xf32>
    %8 = arith.mulf %6, %7 : vector<8x512xf32>
    %9 = vector.extract_strided_slice %8 {offsets = [0, 0], sizes = [8, 64], strides = [1, 1]} : vector<8x512xf32> to vector<8x64xf32>
    %10 = arith.truncf %9 : vector<8x64xf32> to vector<8x64xbf16>
    %c0_6 = arith.constant 0 : index
    %c0_7 = arith.constant 0 : index
    %c0_8 = arith.constant 0 : index
    %11 = vector.load %arg10[%c0_6, %c0_7, %c0_8] : memref<8x8x64xbf16, #tpu.memory_space<vmem>>, vector<1x8x64xbf16>
    %12 = vector.shape_cast %11 : vector<1x8x64xbf16> to vector<8x64xbf16>
    %13 = vector.shape_cast %10 : vector<8x64xbf16> to vector<1x8x64xbf16>
    tpu.vector_store %arg10[%c0_6, %c0_7, %c0_8], %13 {strides = array<i32>} : memref<8x8x64xbf16, #tpu.memory_space<vmem>>, vector<1x8x64xbf16>,
    %14 = vector.extract_strided_slice %8 {offsets = [0, 64], sizes = [8, 64], strides = [1, 1]} : vector<8x512xf32> to vector<8x64xf32>
    %15 = arith.truncf %14 : vector<8x64xf32> to vector<8x64xbf16>
    %c1 = arith.constant 1 : index
    %c0_9 = arith.constant 0 : index
    %c0_10 = arith.constant 0 : index
    %16 = vector.load %arg10[%c1, %c0_9, %c0_10] : memref<8x8x64xbf16, #tpu.memory_space<vmem>>, vector<1x8x64xbf16>
    %17 = vector.shape_cast %16 : vector<1x8x64xbf16> to vector<8x64xbf16>
    %18 = vector.shape_cast %15 : vector<8x64xbf16> to vector<1x8x64xbf16>
    tpu.vector_store %arg10[%c1, %c0_9, %c0_10], %18 {strides = array<i32>} : memref<8x8x64xbf16, #tpu.memory_space<vmem>>, vector<1x8x64xbf16>,
    %19 = vector.extract_strided_slice %8 {offsets = [0, 128], sizes = [8, 64], strides = [1, 1]} : vector<8x512xf32> to vector<8x64xf32>
    %20 = arith.truncf %19 : vector<8x64xf32> to vector<8x64xbf16>
    %c2 = arith.constant 2 : index
    %c0_11 = arith.constant 0 : index
    %c0_12 = arith.constant 0 : index
    %21 = vector.load %arg10[%c2, %c0_11, %c0_12] : memref<8x8x64xbf16, #tpu.memory_space<vmem>>, vector<1x8x64xbf16>
    %22 = vector.shape_cast %21 : vector<1x8x64xbf16> to vector<8x64xbf16>
    %23 = vector.shape_cast %20 : vector<8x64xbf16> to vector<1x8x64xbf16>
    tpu.vector_store %arg10[%c2, %c0_11, %c0_12], %23 {strides = array<i32>} : memref<8x8x64xbf16, #tpu.memory_space<vmem>>, vector<1x8x64xbf16>,
    %24 = vector.extract_strided_slice %8 {offsets = [0, 192], sizes = [8, 64], strides = [1, 1]} : vector<8x512xf32> to vector<8x64xf32>
    %25 = arith.truncf %24 : vector<8x64xf32> to vector<8x64xbf16>
    %c3 = arith.constant 3 : index
    %c0_13 = arith.constant 0 : index
    %c0_14 = arith.constant 0 : index
    %26 = vector.load %arg10[%c3, %c0_13, %c0_14] : memref<8x8x64xbf16, #tpu.memory_space<vmem>>, vector<1x8x64xbf16>
    %27 = vector.shape_cast %26 : vector<1x8x64xbf16> to vector<8x64xbf16>
    %28 = vector.shape_cast %25 : vector<8x64xbf16> to vector<1x8x64xbf16>
    tpu.vector_store %arg10[%c3, %c0_13, %c0_14], %28 {strides = array<i32>} : memref<8x8x64xbf16, #tpu.memory_space<vmem>>, vector<1x8x64xbf16>,
    %29 = vector.extract_strided_slice %8 {offsets = [0, 256], sizes = [8, 64], strides = [1, 1]} : vector<8x512xf32> to vector<8x64xf32>
    %30 = arith.truncf %29 : vector<8x64xf32> to vector<8x64xbf16>
    %c4 = arith.constant 4 : index
    %c0_15 = arith.constant 0 : index
    %c0_16 = arith.constant 0 : index
    %31 = vector.load %arg10[%c4, %c0_15, %c0_16] : memref<8x8x64xbf16, #tpu.memory_space<vmem>>, vector<1x8x64xbf16>
    %32 = vector.shape_cast %31 : vector<1x8x64xbf16> to vector<8x64xbf16>
    %33 = vector.shape_cast %30 : vector<8x64xbf16> to vector<1x8x64xbf16>
    tpu.vector_store %arg10[%c4, %c0_15, %c0_16], %33 {strides = array<i32>} : memref<8x8x64xbf16, #tpu.memory_space<vmem>>, vector<1x8x64xbf16>,
    %34 = vector.extract_strided_slice %8 {offsets = [0, 320], sizes = [8, 64], strides = [1, 1]} : vector<8x512xf32> to vector<8x64xf32>
    %35 = arith.truncf %34 : vector<8x64xf32> to vector<8x64xbf16>
    %c5 = arith.constant 5 : index
    %c0_17 = arith.constant 0 : index
    %c0_18 = arith.constant 0 : index
    %36 = vector.load %arg10[%c5, %c0_17, %c0_18] : memref<8x8x64xbf16, #tpu.memory_space<vmem>>, vector<1x8x64xbf16>
    %37 = vector.shape_cast %36 : vector<1x8x64xbf16> to vector<8x64xbf16>
    %38 = vector.shape_cast %35 : vector<8x64xbf16> to vector<1x8x64xbf16>
    tpu.vector_store %arg10[%c5, %c0_17, %c0_18], %38 {strides = array<i32>} : memref<8x8x64xbf16, #tpu.memory_space<vmem>>, vector<1x8x64xbf16>,
    %39 = vector.extract_strided_slice %8 {offsets = [0, 384], sizes = [8, 64], strides = [1, 1]} : vector<8x512xf32> to vector<8x64xf32>
    %40 = arith.truncf %39 : vector<8x64xf32> to vector<8x64xbf16>
    %c6 = arith.constant 6 : index
    %c0_19 = arith.constant 0 : index
    %c0_20 = arith.constant 0 : index
    %41 = vector.load %arg10[%c6, %c0_19, %c0_20] : memref<8x8x64xbf16, #tpu.memory_space<vmem>>, vector<1x8x64xbf16>
    %42 = vector.shape_cast %41 : vector<1x8x64xbf16> to vector<8x64xbf16>
    %43 = vector.shape_cast %40 : vector<8x64xbf16> to vector<1x8x64xbf16>
    tpu.vector_store %arg10[%c6, %c0_19, %c0_20], %43 {strides = array<i32>} : memref<8x8x64xbf16, #tpu.memory_space<vmem>>, vector<1x8x64xbf16>,
    %44 = vector.extract_strided_slice %8 {offsets = [0, 448], sizes = [8, 64], strides = [1, 1]} : vector<8x512xf32> to vector<8x64xf32>
    %45 = arith.truncf %44 : vector<8x64xf32> to vector<8x64xbf16>
    %c7 = arith.constant 7 : index
    %c0_21 = arith.constant 0 : index
    %c0_22 = arith.constant 0 : index
    %46 = vector.load %arg10[%c7, %c0_21, %c0_22] : memref<8x8x64xbf16, #tpu.memory_space<vmem>>, vector<1x8x64xbf16>
    %47 = vector.shape_cast %46 : vector<1x8x64xbf16> to vector<8x64xbf16>
    %48 = vector.shape_cast %45 : vector<8x64xbf16> to vector<1x8x64xbf16>
    tpu.vector_store %arg10[%c7, %c0_21, %c0_22], %48 {strides = array<i32>} : memref<8x8x64xbf16, #tpu.memory_space<vmem>>, vector<1x8x64xbf16>,
    %c0_23 = arith.constant 0 : index
    %c0_24 = arith.constant 0 : index
    %c0_25 = arith.constant 0 : index
    %49 = vector.load %arg10[%c0_23, %c0_24, %c0_25] : memref<8x8x64xbf16, #tpu.memory_space<vmem>>, vector<8x8x64xbf16>
    %c0_26 = arith.constant 0 : index
    %c0_27 = arith.constant 0 : index
    %c0_28 = arith.constant 0 : index
    %50 = vector.load %arg11[%c0_26, %c0_27, %c0_28] : memref<8x8x64xbf16, #tpu.memory_space<vmem>>, vector<8x8x64xbf16>
    %c0_29 = arith.constant 0 : index
    %c0_30 = arith.constant 0 : index
    %c0_31 = arith.constant 0 : index
    %51 = vector.load %arg12[%c0_29, %c0_30, %c0_31] : memref<8x8x64xbf16, #tpu.memory_space<vmem>>, vector<8x8x64xbf16>
    %cst_32 = arith.constant dense<0.000000e+00> : vector<8x8x8xf32>
    %52 = tpu.matmul %49, %50, %cst_32 {dimension_numbers = #tpu.dot_dimension_numbers<[2], [2], [1], [1], [0, 0, 0, 1, 1, 1], [0], [0]>} : vector<8x8x64xbf16>, vector<8x8x64xbf16>, vector<8x8x8xf32> -> vector<8x8x8xf32>
    %cst_33 = arith.constant dense<0xFF800000> : vector<8x8xf32>
    %53 = vector.multi_reduction <maximumf>, %52, %cst_33 [2] : vector<8x8x8xf32> to vector<8x8xf32>
    %54 = vector.shape_cast %53 : vector<8x8xf32> to vector<8x8x1xf32>
    %55 = vector.broadcast %54 : vector<8x8x1xf32> to vector<8x8x8xf32>
    %56 = arith.subf %52, %55 : vector<8x8x8xf32>
    %57 = math.exp %56 : vector<8x8x8xf32>
    %cst_34 = arith.constant dense<0.000000e+00> : vector<8x8xf32>
    %58 = vector.multi_reduction <add>, %57, %cst_34 [2] : vector<8x8x8xf32> to vector<8x8xf32>
    %59 = vector.shape_cast %58 : vector<8x8xf32> to vector<8x8x1xf32>
    %60 = tpu.reciprocal %59 {approx = true} : vector<8x8x1xf32> -> vector<8x8x1xf32>
    %61 = vector.broadcast %60 : vector<8x8x1xf32> to vector<8x8x8xf32>
    %62 = arith.mulf %57, %61 : vector<8x8x8xf32>
    %63 = arith.truncf %62 : vector<8x8x8xf32> to vector<8x8x8xbf16>
    %cst_35 = arith.constant dense<0.000000e+00> : vector<8x8x64xf32>
    %64 = tpu.matmul %63, %51, %cst_35 {dimension_numbers = #tpu.dot_dimension_numbers<[2], [1], [1], [2], [0, 0, 0, 1, 1, 2], [0], [0]>} : vector<8x8x8xbf16>, vector<8x8x64xbf16>, vector<8x8x64xf32> -> vector<8x8x64xf32>
    %c0_36 = arith.constant 0 : index
    %c0_37 = arith.constant 0 : index
    %c0_38 = arith.constant 0 : index
    %65 = vector.load %arg7[%c0_36, %c0_37, %c0_38] : memref<8x64x32xf32, #tpu.memory_space<vmem>>, vector<8x64x32xf32>
    %cst_39 = arith.constant dense<0.000000e+00> : vector<8x8x32xf32>
    %66 = tpu.matmul %64, %65, %cst_39 {dimension_numbers = #tpu.dot_dimension_numbers<[2], [1], [1], [2], [0, 0, 0, 1, 1, 2], [0], [0]>} : vector<8x8x64xf32>, vector<8x64x32xf32>, vector<8x8x32xf32> -> vector<8x8x32xf32>
    %cst_40 = arith.constant dense<0.000000e+00> : vector<8x32xf32>
    %67 = vector.multi_reduction <add>, %66, %cst_40 [0] : vector<8x8x32xf32> to vector<8x32xf32>
    %c0_41 = arith.constant 0 : index
    %c0_42 = arith.constant 0 : index
    %68 = vector.load %arg8[%c0_41, %c0_42] : memref<1x32xf32, #tpu.memory_space<vmem>>, vector<1x32xf32>
    %69 = vector.broadcast %68 : vector<1x32xf32> to vector<8x32xf32>
    %70 = arith.addf %67, %69 : vector<8x32xf32>
    %c0_43 = arith.constant 0 : index
    %c0_44 = arith.constant 0 : index
    %c0_45 = arith.constant 0 : index
    %71 = vector.load %arg9[%c0_43, %c0_44, %c0_45] : memref<1x8x32xf32, #tpu.memory_space<vmem>>, vector<1x8x32xf32>
    %72 = vector.shape_cast %71 : vector<1x8x32xf32> to vector<8x32xf32>
    %73 = vector.shape_cast %70 : vector<8x32xf32> to vector<1x8x32xf32>
    tpu.vector_store %arg9[%c0_43, %c0_44, %c0_45], %73 {strides = array<i32>} : memref<1x8x32xf32, #tpu.memory_space<vmem>>, vector<1x8x32xf32>,
    return
  }
  func.func @transform_0(%arg0: i32, %arg1: i32) -> (i32, i32, i32) {
    %c0_i32 = arith.constant 0 : i32
    %c0_i32_0 = arith.constant 0 : i32
    return %arg0, %arg1, %c0_i32 : i32, i32, i32
  }
  func.func @transform_1(%arg0: i32, %arg1: i32) -> (i32, i32, i32) {
    %c0_i32 = arith.constant 0 : i32
    %c0_i32_0 = arith.constant 0 : i32
    %c0_i32_1 = arith.constant 0 : i32
    return %arg0, %c0_i32, %c0_i32_0 : i32, i32, i32
  }
  func.func @transform_2(%arg0: i32, %arg1: i32) -> (i32, i32) {
    %c0_i32 = arith.constant 0 : i32
    %c0_i32_0 = arith.constant 0 : i32
    %c0_i32_1 = arith.constant 0 : i32
    return %c0_i32, %c0_i32_0 : i32, i32
  }
  func.func @transform_3(%arg0: i32, %arg1: i32) -> (i32, i32) {
    %c0_i32 = arith.constant 0 : i32
    %c0_i32_0 = arith.constant 0 : i32
    %c0_i32_1 = arith.constant 0 : i32
    return %c0_i32, %c0_i32_0 : i32, i32
  }
  func.func @transform_4(%arg0: i32, %arg1: i32) -> (i32, i32) {
    %c0_i32 = arith.constant 0 : i32
    %c0_i32_0 = arith.constant 0 : i32
    %c0_i32_1 = arith.constant 0 : i32
    return %c0_i32, %c0_i32_0 : i32, i32
  }
  func.func @transform_5(%arg0: i32, %arg1: i32) -> (i32, i32, i32) {
    %c0_i32 = arith.constant 0 : i32
    %c0_i32_0 = arith.constant 0 : i32
    %c0_i32_1 = arith.constant 0 : i32
    %c0_i32_2 = arith.constant 0 : i32
    return %c0_i32, %c0_i32_0, %c0_i32_1 : i32, i32, i32
  }
  func.func @transform_6(%arg0: i32, %arg1: i32) -> (i32, i32) {
    %c0_i32 = arith.constant 0 : i32
    %c0_i32_0 = arith.constant 0 : i32
    %c0_i32_1 = arith.constant 0 : i32
    return %c0_i32, %c0_i32_0 : i32, i32
  }
  func.func @transform_7(%arg0: i32, %arg1: i32) -> (i32, i32, i32) {
    %c0_i32 = arith.constant 0 : i32
    %c0_i32_0 = arith.constant 0 : i32
    return %arg0, %arg1, %c0_i32 : i32, i32, i32
  }
}

</mosaic_0001>

<llo_original>
// kernel: tpu_custom_call.1
$region0: #{tpu_custom_call.1}
  #allocation0 [shape = 'u32[]', space=smem, size = 0x4, offset = 0x4, fixed_abs, tag = 'smem constant byte address 0x4 - core index']
  #allocation1 [shape = 'u32[144,128]{1,0:T(1,128)}', space=vmem, size = 0x12000, scoped, tag = 'internal scratch']
  #allocation2 [shape = 'bf16[8,8,64]{2,1,0:T(8,128)(2,1)}', space=vmem, size = 0x4000, scoped, tag = 'scratch operand']
  #allocation3 [shape = 'bf16[8,8,64]{2,1,0:T(8,128)(2,1)}', space=vmem, size = 0x4000, scoped, tag = 'scratch operand']
  #allocation4 [shape = 'bf16[8,8,64]{2,1,0:T(8,128)(2,1)}', space=vmem, size = 0x4000, scoped, tag = 'scratch operand']
  %s0 = inlined_call_operand.vmem [shape: f32[2,8,32], index: 0, kind: input, shape index: {}]
  %s1 = inlined_call_operand.vmem [shape: f32[2,8,32], index: 1, kind: input, shape index: {}]
  %s2 = inlined_call_operand.vmem [shape: f32[32,512], index: 2, kind: input, shape index: {}]
  %s3 = inlined_call_operand.vmem [shape: f32[32,512], index: 3, kind: input, shape index: {}]
  %s4 = inlined_call_operand.vmem [shape: f32[32,512], index: 4, kind: input, shape index: {}]
  %s5 = inlined_call_operand.vmem [shape: f32[8,64,32], index: 5, kind: input, shape index: {}]
  %s6 = inlined_call_operand.vmem [shape: f32[1,32], index: 6, kind: input, shape index: {}]
  %s7 = inlined_call_operand.hbm [shape: f32[2,8,32], index: 7, kind: output, shape index: {}]
  %s8 = sld [smem:[#allocation0]]
  $region65: #{tpu_custom_call.1} parent=0
    _
  %s10 = ssub.s32 1, %s8
  %s11 = scalar_select 0, %s10, %s8
  $region1: #{tpu_custom_call.1} parent=0
    #allocation5 [shape = 'u8[8192]{0}', space=vmem, size = 0x2000, scoped, tag = 'output window, operand 0']
    #allocation6 [shape = 's32[2]{0}', space=sflag, size = 0x8, scoped, tag = 'scoped memory for tpu_custom_call.1']
    %12 = vsyncpa [#allocation6], 0
    %s13 = scalar_lea.sflag [#allocation6], 1
    %14 = vsyncpa %s13, 0
    loop: start=0, step=1, limit=4
    $region2: #{tpu_custom_call.1} parent=1 // loop_pre_header
      _
    $region3: #{tpu_custom_call.1} parent=1 // loop_header
      %s16 = sphi 0, %s20
      %p17 = scmp.ge.s32.totalorder %s16, 4
      %s23 = sphi 0, %s35
      %s24 = sphi 0, %s31
      %s25 = sphi 0, %s23
      %s26 = sphi 0, %s24
      %s27 = sphi 0, %s25
      %s28 = sphi 0, %s26
      %s40 = sphi 0, %s42
      %s43 = sphi 0, %s40
      %s44 = sphi 0, %s43
      %s60 = sphi 0, %s44
      %s66 = sphi 0, %s68
      %s69 = sphi 0, %s66
      %s70 = sphi 0, %s69
      %s86 = sphi 0, %s70
      %s90 = sphi 0, %s90
      %s92 = sphi 0, %s90
      %s93 = sphi 0, %s92
      %s107 = sphi 0, %s93
      %s111 = sphi 0, %s111
      %s113 = sphi 0, %s111
      %s114 = sphi 0, %s113
      %s128 = sphi 0, %s114
      %s132 = sphi 0, %s132
      %s134 = sphi 0, %s132
      %s135 = sphi 0, %s134
      %s149 = sphi 0, %s135
      %s153 = sphi 0, %s153
      %s155 = sphi 0, %s153
      %s156 = sphi 0, %s155
      %s170 = sphi 0, %s156
      %s174 = sphi 0, %s174
      %s176 = sphi 0, %s174
      %s177 = sphi 0, %s176
      %s191 = sphi 0, %s177
      %s199 = sphi 0, %s201
      %s202 = sphi 0, %s199
      %s203 = sphi 0, %s202
      %s219 = sphi 0, %s203
    $region4: #{tpu_custom_call.1} parent=1 // loop_header_branch
      %19 = sbr.rel (%p17) target = $region8
    $region5: #{tpu_custom_call.1} parent=1 // loop_body
      %s21 = ssub.s32 %s16, 1
      %s22 = ssub.s32 %s16, 2
      %s29 = sadd.s32 1, %s24
      %p30 = scmp.ge.s32.totalorder %s29, 1
      %s31 = scalar_select %p30, 0, %s29
      %s32 = sadd.s32 1, %s23
      %s33 = scalar_select %p30, %s32, %s23
      %p34 = scmp.ge.s32.totalorder %s33, 2
      %s35 = scalar_select %p34, 0, %s33
      %s36 = ssub.s32 %s23, %s35
      %s37 = ssub.s32 %s24, %s31
      %s38 = sor.u32 %s36, %s37
      %p39 = scmp.eq.s32.totalorder %s38, 0
      %s41 = sadd.s32 %s40, 1
      %s42 = scalar_select %p39, %s40, %s41
      %p45 = pneg %p39
      %p46 = scmp.eq.s32.totalorder %s16, 1
      %p47 = por %p45, %p46
      %p48 = scmp.ne.s32.totalorder %s40, %s43
      %p49 = scmp.eq.s32.totalorder %s16, 0
      %p50 = por %p48, %p49
      %p51 = scmp.ne.s32.totalorder %s40, %s43
      %p52 = scmp.eq.s32.totalorder %s21, 1
      %p53 = por %p51, %p52
      %p54 = scmp.ne.s32.totalorder %s43, %s44
      %p55 = scmp.eq.s32.totalorder %s21, 0
      %p56 = por %p54, %p55
      %p57 = scmp.ne.s32.totalorder %s43, %s44
      %p58 = scmp.eq.s32.totalorder %s22, 1
      %p59 = por %p57, %p58
      %p61 = scmp.ne.s32.totalorder %s44, %s60
      %p62 = scmp.eq.s32.totalorder %s22, 0
      %p63 = por %p61, %p62
      %s64 = ssub.s32 %s23, %s35
      %p65 = scmp.eq.s32.totalorder %s64, 0
      %s67 = sadd.s32 %s66, 1
      %s68 = scalar_select %p65, %s66, %s67
      %p71 = pneg %p65
      %p72 = scmp.eq.s32.totalorder %s16, 1
      %p73 = por %p71, %p72
      %p74 = scmp.ne.s32.totalorder %s66, %s69
      %p75 = scmp.eq.s32.totalorder %s16, 0
      %p76 = por %p74, %p75
      %p77 = scmp.ne.s32.totalorder %s66, %s69
      %p78 = scmp.eq.s32.totalorder %s21, 1
      %p79 = por %p77, %p78
      %p80 = scmp.ne.s32.totalorder %s69, %s70
      %p81 = scmp.eq.s32.totalorder %s21, 0
      %p82 = por %p80, %p81
      %p83 = scmp.ne.s32.totalorder %s69, %s70
      %p84 = scmp.eq.s32.totalorder %s22, 1
      %p85 = por %p83, %p84
      %p87 = scmp.ne.s32.totalorder %s70, %s86
      %p88 = scmp.eq.s32.totalorder %s22, 0
      %p89 = por %p87, %p88
      %s91 = sadd.s32 %s90, 1
      %p94 = scmp.eq.s32.totalorder %s16, 1
      %p95 = scmp.ne.s32.totalorder %s90, %s92
      %p96 = scmp.eq.s32.totalorder %s16, 0
      %p97 = por %p95, %p96
      %p98 = scmp.ne.s32.totalorder %s90, %s92
      %p99 = scmp.eq.s32.totalorder %s21, 1
      %p100 = por %p98, %p99
      %p101 = scmp.ne.s32.totalorder %s92, %s93
      %p102 = scmp.eq.s32.totalorder %s21, 0
      %p103 = por %p101, %p102
      %p104 = scmp.ne.s32.totalorder %s92, %s93
      %p105 = scmp.eq.s32.totalorder %s22, 1
      %p106 = por %p104, %p105
      %p108 = scmp.ne.s32.totalorder %s93, %s107
      %p109 = scmp.eq.s32.totalorder %s22, 0
      %p110 = por %p108, %p109
      %s112 = sadd.s32 %s111, 1
      %p115 = scmp.eq.s32.totalorder %s16, 1
      %p116 = scmp.ne.s32.totalorder %s111, %s113
      %p117 = scmp.eq.s32.totalorder %s16, 0
      %p118 = por %p116, %p117
      %p119 = scmp.ne.s32.totalorder %s111, %s113
      %p120 = scmp.eq.s32.totalorder %s21, 1
      %p121 = por %p119, %p120
      %p122 = scmp.ne.s32.totalorder %s113, %s114
      %p123 = scmp.eq.s32.totalorder %s21, 0
      %p124 = por %p122, %p123
      %p125 = scmp.ne.s32.totalorder %s113, %s114
      %p126 = scmp.eq.s32.totalorder %s22, 1
      %p127 = por %p125, %p126
      %p129 = scmp.ne.s32.totalorder %s114, %s128
      %p130 = scmp.eq.s32.totalorder %s22, 0
      %p131 = por %p129, %p130
      %s133 = sadd.s32 %s132, 1
      %p136 = scmp.eq.s32.totalorder %s16, 1
      %p137 = scmp.ne.s32.totalorder %s132, %s134
      %p138 = scmp.eq.s32.totalorder %s16, 0
      %p139 = por %p137, %p138
      %p140 = scmp.ne.s32.totalorder %s132, %s134
      %p141 = scmp.eq.s32.totalorder %s21, 1
      %p142 = por %p140, %p141
      %p143 = scmp.ne.s32.totalorder %s134, %s135
      %p144 = scmp.eq.s32.totalorder %s21, 0
      %p145 = por %p143, %p144
      %p146 = scmp.ne.s32.totalorder %s134, %s135
      %p147 = scmp.eq.s32.totalorder %s22, 1
      %p148 = por %p146, %p147
      %p150 = scmp.ne.s32.totalorder %s135, %s149
      %p151 = scmp.eq.s32.totalorder %s22, 0
      %p152 = por %p150, %p151
      %s154 = sadd.s32 %s153, 1
      %p157 = scmp.eq.s32.totalorder %s16, 1
      %p158 = scmp.ne.s32.totalorder %s153, %s155
      %p159 = scmp.eq.s32.totalorder %s16, 0
      %p160 = por %p158, %p159
      %p161 = scmp.ne.s32.totalorder %s153, %s155
      %p162 = scmp.eq.s32.totalorder %s21, 1
      %p163 = por %p161, %p162
      %p164 = scmp.ne.s32.totalorder %s155, %s156
      %p165 = scmp.eq.s32.totalorder %s21, 0
      %p166 = por %p164, %p165
      %p167 = scmp.ne.s32.totalorder %s155, %s156
      %p168 = scmp.eq.s32.totalorder %s22, 1
      %p169 = por %p167, %p168
      %p171 = scmp.ne.s32.totalorder %s156, %s170
      %p172 = scmp.eq.s32.totalorder %s22, 0
      %p173 = por %p171, %p172
      %s175 = sadd.s32 %s174, 1
      %p178 = scmp.eq.s32.totalorder %s16, 1
      %p179 = scmp.ne.s32.totalorder %s174, %s176
      %p180 = scmp.eq.s32.totalorder %s16, 0
      %p181 = por %p179, %p180
      %p182 = scmp.ne.s32.totalorder %s174, %s176
      %p183 = scmp.eq.s32.totalorder %s21, 1
      %p184 = por %p182, %p183
      %p185 = scmp.ne.s32.totalorder %s176, %s177
      %p186 = scmp.eq.s32.totalorder %s21, 0
      %p187 = por %p185, %p186
      %p188 = scmp.ne.s32.totalorder %s176, %s177
      %p189 = scmp.eq.s32.totalorder %s22, 1
      %p190 = por %p188, %p189
      %p192 = scmp.ne.s32.totalorder %s177, %s191
      %p193 = scmp.eq.s32.totalorder %s22, 0
      %p194 = por %p192, %p193
      %s195 = ssub.s32 %s23, %s35
      %s196 = ssub.s32 %s24, %s31
      %s197 = sor.u32 %s195, %s196
      %p198 = scmp.eq.s32.totalorder %s197, 0
      %s200 = sadd.s32 %s199, 1
      %s201 = scalar_select %p198, %s199, %s200
      %p204 = pneg %p198
      %p205 = scmp.eq.s32.totalorder %s16, 1
      %p206 = por %p204, %p205
      %p207 = scmp.ne.s32.totalorder %s199, %s202
      %p208 = scmp.eq.s32.totalorder %s16, 0
      %p209 = por %p207, %p208
      %p210 = scmp.ne.s32.totalorder %s199, %s202
      %p211 = scmp.eq.s32.totalorder %s21, 1
      %p212 = por %p210, %p211
      %p213 = scmp.ne.s32.totalorder %s202, %s203
      %p214 = scmp.eq.s32.totalorder %s21, 0
      %p215 = por %p213, %p214
      %p216 = scmp.ne.s32.totalorder %s202, %s203
      %p217 = scmp.eq.s32.totalorder %s22, 1
      %p218 = por %p216, %p217
      %p220 = scmp.ne.s32.totalorder %s203, %s219
      %p221 = scmp.eq.s32.totalorder %s22, 0
      %p222 = por %p220, %p221
      %p223 = scmp.le.s32.totalorder 1, %s16
      %p224 = scmp.lt.s32.totalorder %s16, 3
      %p225 = pnand %p223, %p224
      %p226 = pneg %p225
      // Predicated region
      $region9: #{tpu_custom_call.1} parent=5 // pred_check
        _
      $region10: #{tpu_custom_call.1} parent=5 // pred_check_branch
        %228 = sbr.rel (%p225) target = $region12
      $region11: #{tpu_custom_call.1} parent=5 // pred_region
        %s229 = ssub.s32 %s16, 1
        // Predicated region
        $region13: #{tpu_custom_call.1} parent=11 // pred_check
          %p230 = pneg %p103
        $region14: #{tpu_custom_call.1} parent=11 // pred_check_branch
          %232 = sbr.rel (%p230) target = $region16
        $region15: #{tpu_custom_call.1} parent=11 // pred_region
          _
        $region16: #{tpu_custom_call.1} parent=11 // pred_fallthru
          _
        // Predicated region
        $region17: #{tpu_custom_call.1} parent=11 // pred_check
          %p233 = pneg %p124
        $region18: #{tpu_custom_call.1} parent=11 // pred_check_branch
          %235 = sbr.rel (%p233) target = $region20
        $region19: #{tpu_custom_call.1} parent=11 // pred_region
          _
        $region20: #{tpu_custom_call.1} parent=11 // pred_fallthru
          _
        // Predicated region
        $region21: #{tpu_custom_call.1} parent=11 // pred_check
          %p236 = pneg %p145
        $region22: #{tpu_custom_call.1} parent=11 // pred_check_branch
          %238 = sbr.rel (%p236) target = $region24
        $region23: #{tpu_custom_call.1} parent=11 // pred_region
          _
        $region24: #{tpu_custom_call.1} parent=11 // pred_fallthru
          _
        // Predicated region
        $region25: #{tpu_custom_call.1} parent=11 // pred_check
          %p239 = pneg %p166
        $region26: #{tpu_custom_call.1} parent=11 // pred_check_branch
          %241 = sbr.rel (%p239) target = $region28
        $region27: #{tpu_custom_call.1} parent=11 // pred_region
          _
        $region28: #{tpu_custom_call.1} parent=11 // pred_fallthru
          _
        // Predicated region
        $region29: #{tpu_custom_call.1} parent=11 // pred_check
          %p242 = pneg %p187
        $region30: #{tpu_custom_call.1} parent=11 // pred_check_branch
          %244 = sbr.rel (%p242) target = $region32
        $region31: #{tpu_custom_call.1} parent=11 // pred_region
          _
        $region32: #{tpu_custom_call.1} parent=11 // pred_fallthru
          _
      $region12: #{tpu_custom_call.1} parent=5 // pred_fallthru
        _
      %p245 = scmp.lt.s32.totalorder %s16, 2
      // Predicated region
      $region33: #{tpu_custom_call.1} parent=5 // pred_check
        %p246 = pneg %p245
      $region34: #{tpu_custom_call.1} parent=5 // pred_check_branch
        %248 = sbr.rel (%p246) target = $region36
      $region35: #{tpu_custom_call.1} parent=5 // pred_region
        // Predicated region
        $region37: #{tpu_custom_call.1} parent=35 // pred_check
          %p249 = pneg %p50
        $region38: #{tpu_custom_call.1} parent=35 // pred_check_branch
          %251 = sbr.rel (%p249) target = $region40
        $region39: #{tpu_custom_call.1} parent=35 // pred_region
          %p252 = scmp.lt.s32.totalorder %s23, 1
          %s253 = scalar_select %p252, %s23, 1
          %p254 = scmp.lt.s32.totalorder %s24, 0
          %s255 = scalar_select %p254, %s24, 0
          %s256 = sadd.s32 %s255, %s253
          %s257 = smul.addr %s256, 8
          %s258 = scalar_lea.vmem %s0, %s257
        $region40: #{tpu_custom_call.1} parent=35 // pred_fallthru
          _
        // Predicated region
        $region41: #{tpu_custom_call.1} parent=35 // pred_check
          %p259 = pneg %p76
        $region42: #{tpu_custom_call.1} parent=35 // pred_check_branch
          %261 = sbr.rel (%p259) target = $region44
        $region43: #{tpu_custom_call.1} parent=35 // pred_region
          %p262 = scmp.lt.s32.totalorder %s23, 1
          %s263 = scalar_select %p262, %s23, 1
          %s264 = smul.addr %s263, 8
          %s265 = scalar_lea.vmem %s1, %s264
        $region44: #{tpu_custom_call.1} parent=35 // pred_fallthru
          _
      $region36: #{tpu_custom_call.1} parent=5 // pred_fallthru
        _
      %p266 = scmp.le.s32.totalorder 1, %s16
      %p267 = scmp.lt.s32.totalorder %s16, 3
      %p268 = pnand %p266, %p267
      %p269 = pneg %p268
      // Predicated region
      $region45: #{tpu_custom_call.1} parent=5 // pred_check
        _
      $region46: #{tpu_custom_call.1} parent=5 // pred_check_branch
        %271 = sbr.rel (%p268) target = $region48
      $region47: #{tpu_custom_call.1} parent=5 // pred_region
        %s272 = ssub.s32 %s16, 1
        %p273 = scmp.lt.s32.totalorder %s25, 1
        %s274 = scalar_select %p273, %s25, 1
        %p275 = scmp.lt.s32.totalorder %s26, 0
        %s276 = scalar_select %p275, %s26, 0
        %s277 = sadd.s32 %s276, %s274
        %s278 = smul.addr %s277, 8
        %s279 = scalar_lea.vmem %s0, %s278
        %p280 = pneg %p56
        %p281 = pneg %p53
        %p282 = scmp.lt.s32.totalorder %s25, 1
        %s283 = scalar_select %p282, %s25, 1
        %s284 = smul.addr %s283, 8
        %s285 = scalar_lea.vmem %s1, %s284
        %p286 = pneg %p82
        %p287 = pneg %p79
        %p288 = pneg %p103
        %p289 = pneg %p100
        %p290 = pneg %p124
        %p291 = pneg %p121
        %p292 = pneg %p145
        %p293 = pneg %p142
        %p294 = pneg %p166
        %p295 = pneg %p163
        %p296 = pneg %p187
        %p297 = pneg %p184
        %p298 = pneg %p215
        %p299 = pneg %p212
        %s300 = sand.u32 %s202, 1
        %s301 = scalar_lea.sflag [#allocation6], %s300
        %s302 = sand.u32 %s202, 1
        %s303 = smul.addr %s302, 8
        %s304 = scalar_lea.vmem [#allocation5], %s303
        %p305 = scmp.lt.s32.totalorder %s25, 1
        %s306 = scalar_select %p305, %s25, 1
        %p307 = scmp.lt.s32.totalorder %s26, 0
        %s308 = scalar_select %p307, %s26, 0
        %s309 = sadd.s32 %s308, %s306
        %s310 = smul.addr %s309, 8
        %s311 = scalar_lea.vmem %s0, %s310
        %p312 = scmp.lt.s32.totalorder %s25, 1
        %s313 = scalar_select %p312, %s25, 1
        %s314 = smul.addr %s313, 8
        %s315 = scalar_lea.vmem %s1, %s314
        %p317 = scmp.eq.s32.totalorder %s26, 0
        // Predicated region
        $region49: #{tpu_custom_call.1} parent=47 // pred_check
          %p318 = pneg %p317
        $region50: #{tpu_custom_call.1} parent=47 // pred_check_branch
          %320 = sbr.rel (%p318) target = $region52
        $region51: #{tpu_custom_call.1} parent=47 // pred_region
          %v321 = vld [vmem:[%s315] sm:$0xff]
          %v322 = vld [vmem:[%s3] sm:$0xff]
          %v323 = vld [vmem:[%s3 + $0x8] sm:$0xff]
          %v324 = vld [vmem:[%s3 + $0x10] sm:$0xff]
          %v325 = vld [vmem:[%s3 + $0x18] sm:$0xff]
          %v326 = vld [vmem:[%s3 + $0x20] sm:$0xff]
          %v327 = vld [vmem:[%s3 + $0x28] sm:$0xff]
          %v328 = vld [vmem:[%s3 + $0x30] sm:$0xff]
          %v329 = vld [vmem:[%s3 + $0x38] sm:$0xff]
          %v330 = vld [vmem:[%s3 + $0x40] sm:$0xff]
          %v331 = vld [vmem:[%s3 + $0x48] sm:$0xff]
          %v332 = vld [vmem:[%s3 + $0x50] sm:$0xff]
          %v333 = vld [vmem:[%s3 + $0x58] sm:$0xff]
          %v334 = vld [vmem:[%s3 + $0x60] sm:$0xff]
          %v335 = vld [vmem:[%s3 + $0x68] sm:$0xff]
          %v336 = vld [vmem:[%s3 + $0x70] sm:$0xff]
          %v337 = vld [vmem:[%s3 + $0x78] sm:$0xff]
          %vm338 = vcmask 261120
          %v340 = vsel %vm338, %v321, 0
          %342 = vmatprep.subr.mxu0 0.0
          %343 = vmatpush1.msra.mxu0 0.0
          %344 = vmatprep.subr.mxu0 0.0
          %345 = vmatpush1.msra.mxu0 0.0
          %346 = vmatprep.subr.mxu0 0.0
          %347 = vmatpush1.msra.mxu0 0.0
          %348 = vmatprep.subr.mxu0 0.0
          %349 = vmatpush1.msra.mxu0 0.0
          %350 = vmatprep.subr.mxu0 0.0
          %351 = vmatpush1.msra.mxu0 0.0
          %352 = vmatprep.subr.mxu0 0.0
          %353 = vmatpush1.msra.mxu0 0.0
          %354 = vmatprep.subr.mxu0 0.0
          %355 = vmatpush1.msra.mxu0 0.0
          %356 = vmatprep.subr.mxu0 0.0
          %357 = vmatpush1.msra.mxu0 0.0
          %358 = vmatprep.subr.mxu0 0.0
          %359 = vmatpush1.msra.mxu0 0.0
          %360 = vmatprep.subr.mxu0 0.0
          %361 = vmatpush1.msra.mxu0 0.0
          %362 = vmatprep.subr.mxu0 0.0
          %363 = vmatpush1.msra.mxu0 0.0
          %364 = vmatprep.subr.mxu0 0.0
          %365 = vmatpush1.msra.mxu0 0.0
          %366 = vmatprep.subr.mxu0 %v335
          %367 = vmatpush1.msra.mxu0 %v334
          %368 = vmatprep.subr.mxu0 %v331
          %369 = vmatpush1.msra.mxu0 %v330
          %370 = vmatprep.subr.mxu0 %v327
          %371 = vmatpush1.msra.mxu0 %v326
          %372 = vmatprep.subr.mxu0 %v323
          %373 = vmatpush1.msra.mxu0 %v322
          %374 = vmatprep.subr.mxu0 0.0
          %375 = vmatpush2.msra.mxu0 0.0
          %376 = vmatprep.subr.mxu0 0.0
          %377 = vmatpush2.msra.mxu0 0.0
          %378 = vmatprep.subr.mxu0 0.0
          %379 = vmatpush2.msra.mxu0 0.0
          %380 = vmatprep.subr.mxu0 0.0
          %381 = vmatpush2.msra.mxu0 0.0
          %382 = vmatprep.subr.mxu0 0.0
          %383 = vmatpush2.msra.mxu0 0.0
          %384 = vmatprep.subr.mxu0 0.0
          %385 = vmatpush2.msra.mxu0 0.0
          %386 = vmatprep.subr.mxu0 0.0
          %387 = vmatpush2.msra.mxu0 0.0
          %388 = vmatprep.subr.mxu0 0.0
          %389 = vmatpush2.msra.mxu0 0.0
          %390 = vmatprep.subr.mxu0 0.0
          %391 = vmatpush2.msra.mxu0 0.0
          %392 = vmatprep.subr.mxu0 0.0
          %393 = vmatpush2.msra.mxu0 0.0
          %394 = vmatprep.subr.mxu0 0.0
          %395 = vmatpush2.msra.mxu0 0.0
          %396 = vmatprep.subr.mxu0 0.0
          %397 = vmatpush2.msra.mxu0 0.0
          %398 = vmatprep.subr.mxu0 0.0
          %399 = vmatpush2.msra.mxu0 0.0
          %400 = vmatprep.subr.mxu0 0.0
          %401 = vmatpush2.msra.mxu0 0.0
          %402 = vmatprep.subr.mxu0 0.0
          %403 = vmatpush2.msra.mxu0 0.0
          %404 = vmatprep.subr.mxu0 0.0
          %405 = vmatpush2.msra.mxu0 0.0
          %406 = vmatprep.mubr.f32.mxu0 0.0
          %407 = vmatmul.mubr.f32.gmra.mxu0 %v340
          %v408 = vpop.f32.mrf.mxu0
          %v409 = vadd.f32 0.0, %v408
          %v410 = vpop.f32.mrf.mxu0
          %v411 = vadd.f32 0.0, %v410
          %412 = vdwg.mxu0
          %413 = vmatprep.subr.mxu0 0.0
          %414 = vmatpush1.msra.mxu0 0.0
          %415 = vmatprep.subr.mxu0 0.0
          %416 = vmatpush1.msra.mxu0 0.0
          %417 = vmatprep.subr.mxu0 0.0
          %418 = vmatpush1.msra.mxu0 0.0
          %419 = vmatprep.subr.mxu0 0.0
          %420 = vmatpush1.msra.mxu0 0.0
          %421 = vmatprep.subr.mxu0 0.0
          %422 = vmatpush1.msra.mxu0 0.0
          %423 = vmatprep.subr.mxu0 0.0
          %424 = vmatpush1.msra.mxu0 0.0
          %425 = vmatprep.subr.mxu0 0.0
          %426 = vmatpush1.msra.mxu0 0.0
          %427 = vmatprep.subr.mxu0 0.0
          %428 = vmatpush1.msra.mxu0 0.0
          %429 = vmatprep.subr.mxu0 0.0
          %430 = vmatpush1.msra.mxu0 0.0
          %431 = vmatprep.subr.mxu0 0.0
          %432 = vmatpush1.msra.mxu0 0.0
          %433 = vmatprep.subr.mxu0 0.0
          %434 = vmatpush1.msra.mxu0 0.0
          %435 = vmatprep.subr.mxu0 0.0
          %436 = vmatpush1.msra.mxu0 0.0
          %437 = vmatprep.subr.mxu0 %v337
          %438 = vmatpush1.msra.mxu0 %v336
          %439 = vmatprep.subr.mxu0 %v333
          %440 = vmatpush1.msra.mxu0 %v332
          %441 = vmatprep.subr.mxu0 %v329
          %442 = vmatpush1.msra.mxu0 %v328
          %443 = vmatprep.subr.mxu0 %v325
          %444 = vmatpush1.msra.mxu0 %v324
          %445 = vmatprep.subr.mxu0 0.0
          %446 = vmatpush2.msra.mxu0 0.0
          %447 = vmatprep.subr.mxu0 0.0
          %448 = vmatpush2.msra.mxu0 0.0
          %449 = vmatprep.subr.mxu0 0.0
          %450 = vmatpush2.msra.mxu0 0.0
          %451 = vmatprep.subr.mxu0 0.0
          %452 = vmatpush2.msra.mxu0 0.0
          %453 = vmatprep.subr.mxu0 0.0
          %454 = vmatpush2.msra.mxu0 0.0
          %455 = vmatprep.subr.mxu0 0.0
          %456 = vmatpush2.msra.mxu0 0.0
          %457 = vmatprep.subr.mxu0 0.0
          %458 = vmatpush2.msra.mxu0 0.0
          %459 = vmatprep.subr.mxu0 0.0
          %460 = vmatpush2.msra.mxu0 0.0
          %461 = vmatprep.subr.mxu0 0.0
          %462 = vmatpush2.msra.mxu0 0.0
          %463 = vmatprep.subr.mxu0 0.0
          %464 = vmatpush2.msra.mxu0 0.0
          %465 = vmatprep.subr.mxu0 0.0
          %466 = vmatpush2.msra.mxu0 0.0
          %467 = vmatprep.subr.mxu0 0.0
          %468 = vmatpush2.msra.mxu0 0.0
          %469 = vmatprep.subr.mxu0 0.0
          %470 = vmatpush2.msra.mxu0 0.0
          %471 = vmatprep.subr.mxu0 0.0
          %472 = vmatpush2.msra.mxu0 0.0
          %473 = vmatprep.subr.mxu0 0.0
          %474 = vmatpush2.msra.mxu0 0.0
          %475 = vmatprep.subr.mxu0 0.0
          %476 = vmatpush2.msra.mxu0 0.0
          %477 = vmatprep.mubr.f32.mxu0 0.0
          %478 = vmatmul.mubr.f32.gmra.mxu0 %v340
          %v479 = vpop.f32.mrf.mxu0
          %v480 = vadd.f32 0.0, %v479
          %v481 = vpop.f32.mrf.mxu0
          %v482 = vadd.f32 0.0, %v481
          %483 = vdwg.mxu0
          %v484 = vld [vmem:[%s4] sm:$0xff]
          %v485 = vld [vmem:[%s4 + $0x8] sm:$0xff]
          %v486 = vld [vmem:[%s4 + $0x10] sm:$0xff]
          %v487 = vld [vmem:[%s4 + $0x18] sm:$0xff]
          %v488 = vld [vmem:[%s4 + $0x20] sm:$0xff]
          %v489 = vld [vmem:[%s4 + $0x28] sm:$0xff]
          %v490 = vld [vmem:[%s4 + $0x30] sm:$0xff]
          %v491 = vld [vmem:[%s4 + $0x38] sm:$0xff]
          %v492 = vld [vmem:[%s4 + $0x40] sm:$0xff]
          %v493 = vld [vmem:[%s4 + $0x48] sm:$0xff]
          %v494 = vld [vmem:[%s4 + $0x50] sm:$0xff]
          %v495 = vld [vmem:[%s4 + $0x58] sm:$0xff]
          %v496 = vld [vmem:[%s4 + $0x60] sm:$0xff]
          %v497 = vld [vmem:[%s4 + $0x68] sm:$0xff]
          %v498 = vld [vmem:[%s4 + $0x70] sm:$0xff]
          %v499 = vld [vmem:[%s4 + $0x78] sm:$0xff]
          %500 = vmatprep.subr.mxu0 0.0
          %501 = vmatpush1.msra.mxu0 0.0
          %502 = vmatprep.subr.mxu0 0.0
          %503 = vmatpush1.msra.mxu0 0.0
          %504 = vmatprep.subr.mxu0 0.0
          %505 = vmatpush1.msra.mxu0 0.0
          %506 = vmatprep.subr.mxu0 0.0
          %507 = vmatpush1.msra.mxu0 0.0
          %508 = vmatprep.subr.mxu0 0.0
          %509 = vmatpush1.msra.mxu0 0.0
          %510 = vmatprep.subr.mxu0 0.0
          %511 = vmatpush1.msra.mxu0 0.0
          %512 = vmatprep.subr.mxu0 0.0
          %513 = vmatpush1.msra.mxu0 0.0
          %514 = vmatprep.subr.mxu0 0.0
          %515 = vmatpush1.msra.mxu0 0.0
          %516 = vmatprep.subr.mxu0 0.0
          %517 = vmatpush1.msra.mxu0 0.0
          %518 = vmatprep.subr.mxu0 0.0
          %519 = vmatpush1.msra.mxu0 0.0
          %520 = vmatprep.subr.mxu0 0.0
          %521 = vmatpush1.msra.mxu0 0.0
          %522 = vmatprep.subr.mxu0 0.0
          %523 = vmatpush1.msra.mxu0 0.0
          %524 = vmatprep.subr.mxu0 %v497
          %525 = vmatpush1.msra.mxu0 %v496
          %526 = vmatprep.subr.mxu0 %v493
          %527 = vmatpush1.msra.mxu0 %v492
          %528 = vmatprep.subr.mxu0 %v489
          %529 = vmatpush1.msra.mxu0 %v488
          %530 = vmatprep.subr.mxu0 %v485
          %531 = vmatpush1.msra.mxu0 %v484
          %532 = vmatprep.subr.mxu0 0.0
          %533 = vmatpush2.msra.mxu0 0.0
          %534 = vmatprep.subr.mxu0 0.0
          %535 = vmatpush2.msra.mxu0 0.0
          %536 = vmatprep.subr.mxu0 0.0
          %537 = vmatpush2.msra.mxu0 0.0
          %538 = vmatprep.subr.mxu0 0.0
          %539 = vmatpush2.msra.mxu0 0.0
          %540 = vmatprep.subr.mxu0 0.0
          %541 = vmatpush2.msra.mxu0 0.0
          %542 = vmatprep.subr.mxu0 0.0
          %543 = vmatpush2.msra.mxu0 0.0
          %544 = vmatprep.subr.mxu0 0.0
          %545 = vmatpush2.msra.mxu0 0.0
          %546 = vmatprep.subr.mxu0 0.0
          %547 = vmatpush2.msra.mxu0 0.0
          %548 = vmatprep.subr.mxu0 0.0
          %549 = vmatpush2.msra.mxu0 0.0
          %550 = vmatprep.subr.mxu0 0.0
          %551 = vmatpush2.msra.mxu0 0.0
          %552 = vmatprep.subr.mxu0 0.0
          %553 = vmatpush2.msra.mxu0 0.0
          %554 = vmatprep.subr.mxu0 0.0
          %555 = vmatpush2.msra.mxu0 0.0
          %556 = vmatprep.subr.mxu0 0.0
          %557 = vmatpush2.msra.mxu0 0.0
          %558 = vmatprep.subr.mxu0 0.0
          %559 = vmatpush2.msra.mxu0 0.0
          %560 = vmatprep.subr.mxu0 0.0
          %561 = vmatpush2.msra.mxu0 0.0
          %562 = vmatprep.subr.mxu0 0.0
          %563 = vmatpush2.msra.mxu0 0.0
          %564 = vmatprep.mubr.f32.mxu0 0.0
          %565 = vmatmul.mubr.f32.gmra.mxu0 %v340
          %v566 = vpop.f32.mrf.mxu0
          %v567 = vadd.f32 0.0, %v566
          %v568 = vpop.f32.mrf.mxu0
          %v569 = vadd.f32 0.0, %v568
          %570 = vdwg.mxu0
          %571 = vmatprep.subr.mxu0 0.0
          %572 = vmatpush1.msra.mxu0 0.0
          %573 = vmatprep.subr.mxu0 0.0
          %574 = vmatpush1.msra.mxu0 0.0
          %575 = vmatprep.subr.mxu0 0.0
          %576 = vmatpush1.msra.mxu0 0.0
          %577 = vmatprep.subr.mxu0 0.0
          %578 = vmatpush1.msra.mxu0 0.0
          %579 = vmatprep.subr.mxu0 0.0
          %580 = vmatpush1.msra.mxu0 0.0
          %581 = vmatprep.subr.mxu0 0.0
          %582 = vmatpush1.msra.mxu0 0.0
          %583 = vmatprep.subr.mxu0 0.0
          %584 = vmatpush1.msra.mxu0 0.0
          %585 = vmatprep.subr.mxu0 0.0
          %586 = vmatpush1.msra.mxu0 0.0
          %587 = vmatprep.subr.mxu0 0.0
          %588 = vmatpush1.msra.mxu0 0.0
          %589 = vmatprep.subr.mxu0 0.0
          %590 = vmatpush1.msra.mxu0 0.0
          %591 = vmatprep.subr.mxu0 0.0
          %592 = vmatpush1.msra.mxu0 0.0
          %593 = vmatprep.subr.mxu0 0.0
          %594 = vmatpush1.msra.mxu0 0.0
          %595 = vmatprep.subr.mxu0 %v499
          %596 = vmatpush1.msra.mxu0 %v498
          %597 = vmatprep.subr.mxu0 %v495
          %598 = vmatpush1.msra.mxu0 %v494
          %599 = vmatprep.subr.mxu0 %v491
          %600 = vmatpush1.msra.mxu0 %v490
          %601 = vmatprep.subr.mxu0 %v487
          %602 = vmatpush1.msra.mxu0 %v486
          %603 = vmatprep.subr.mxu0 0.0
          %604 = vmatpush2.msra.mxu0 0.0
          %605 = vmatprep.subr.mxu0 0.0
          %606 = vmatpush2.msra.mxu0 0.0
          %607 = vmatprep.subr.mxu0 0.0
          %608 = vmatpush2.msra.mxu0 0.0
          %609 = vmatprep.subr.mxu0 0.0
          %610 = vmatpush2.msra.mxu0 0.0
          %611 = vmatprep.subr.mxu0 0.0
          %612 = vmatpush2.msra.mxu0 0.0
          %613 = vmatprep.subr.mxu0 0.0
          %614 = vmatpush2.msra.mxu0 0.0
          %615 = vmatprep.subr.mxu0 0.0
          %616 = vmatpush2.msra.mxu0 0.0
          %617 = vmatprep.subr.mxu0 0.0
          %618 = vmatpush2.msra.mxu0 0.0
          %619 = vmatprep.subr.mxu0 0.0
          %620 = vmatpush2.msra.mxu0 0.0
          %621 = vmatprep.subr.mxu0 0.0
          %622 = vmatpush2.msra.mxu0 0.0
          %623 = vmatprep.subr.mxu0 0.0
          %624 = vmatpush2.msra.mxu0 0.0
          %625 = vmatprep.subr.mxu0 0.0
          %626 = vmatpush2.msra.mxu0 0.0
          %627 = vmatprep.subr.mxu0 0.0
          %628 = vmatpush2.msra.mxu0 0.0
          %629 = vmatprep.subr.mxu0 0.0
          %630 = vmatpush2.msra.mxu0 0.0
          %631 = vmatprep.subr.mxu0 0.0
          %632 = vmatpush2.msra.mxu0 0.0
          %633 = vmatprep.subr.mxu0 0.0
          %634 = vmatpush2.msra.mxu0 0.0
          %635 = vmatprep.mubr.f32.mxu0 0.0
          %636 = vmatmul.mubr.f32.gmra.mxu0 %v340
          %v637 = vpop.f32.mrf.mxu0
          %v638 = vadd.f32 0.0, %v637
          %v639 = vpop.f32.mrf.mxu0
          %v640 = vadd.f32 0.0, %v639
          %641 = vdwg.mxu0
          %v642 = vpack.c.bf16 %v409, %v409
          %vm643 = vcmask 519168
          %644 = vst.msk [vmem:[#allocation3] sm:$0xf] %vm643, %v642
          %v645 = vpack.c.bf16 %v567, %v567
          %646 = vst.msk [vmem:[#allocation4] sm:$0xf] %vm643, %v645
          %v648 = vunpack.c.l.b16 %v642
          %v649 = vpack.c.b16 %v648, %v648
          %650 = vrot.lane.b32.xlu0 %v649, 64
          %v651 = vpop.permute.xlu0 %650
          %s653 = scalar_lea.vmem [#allocation3], 4
          %654 = vst.msk [vmem:[%s653] sm:$0xf] %vm643, %v651
          %v656 = vunpack.c.l.b16 %v645
          %v657 = vpack.c.b16 %v656, %v656
          %658 = vrot.lane.b32.xlu0 %v657, 64
          %v659 = vpop.permute.xlu0 %658
          %s661 = scalar_lea.vmem [#allocation4], 4
          %662 = vst.msk [vmem:[%s661] sm:$0xf] %vm643, %v659
          %v663 = vpack.c.bf16 %v411, %v411
          %s664 = scalar_lea.vmem [#allocation3], 8
          %665 = vst.msk [vmem:[%s664] sm:$0xf] %vm643, %v663
          %v666 = vpack.c.bf16 %v569, %v569
          %s667 = scalar_lea.vmem [#allocation4], 8
          %668 = vst.msk [vmem:[%s667] sm:$0xf] %vm643, %v666
          %v670 = vunpack.c.l.b16 %v663
          %v671 = vpack.c.b16 %v670, %v670
          %672 = vrot.lane.b32.xlu0 %v671, 64
          %v673 = vpop.permute.xlu0 %672
          %s675 = scalar_lea.vmem [#allocation3], 12
          %676 = vst.msk [vmem:[%s675] sm:$0xf] %vm643, %v673
          %v678 = vunpack.c.l.b16 %v666
          %v679 = vpack.c.b16 %v678, %v678
          %680 = vrot.lane.b32.xlu0 %v679, 64
          %v681 = vpop.permute.xlu0 %680
          %s683 = scalar_lea.vmem [#allocation4], 12
          %684 = vst.msk [vmem:[%s683] sm:$0xf] %vm643, %v681
          %v685 = vpack.c.bf16 %v480, %v480
          %s686 = scalar_lea.vmem [#allocation3], 16
          %687 = vst.msk [vmem:[%s686] sm:$0xf] %vm643, %v685
          %v688 = vpack.c.bf16 %v638, %v638
          %s689 = scalar_lea.vmem [#allocation4], 16
          %690 = vst.msk [vmem:[%s689] sm:$0xf] %vm643, %v688
          %v692 = vunpack.c.l.b16 %v685
          %v693 = vpack.c.b16 %v692, %v692
          %694 = vrot.lane.b32.xlu0 %v693, 64
          %v695 = vpop.permute.xlu0 %694
          %s697 = scalar_lea.vmem [#allocation3], 20
          %698 = vst.msk [vmem:[%s697] sm:$0xf] %vm643, %v695
          %v700 = vunpack.c.l.b16 %v688
          %v701 = vpack.c.b16 %v700, %v700
          %702 = vrot.lane.b32.xlu0 %v701, 64
          %v703 = vpop.permute.xlu0 %702
          %s705 = scalar_lea.vmem [#allocation4], 20
          %706 = vst.msk [vmem:[%s705] sm:$0xf] %vm643, %v703
          %v707 = vpack.c.bf16 %v482, %v482
          %s708 = scalar_lea.vmem [#allocation3], 24
          %709 = vst.msk [vmem:[%s708] sm:$0xf] %vm643, %v707
          %v710 = vpack.c.bf16 %v640, %v640
          %s711 = scalar_lea.vmem [#allocation4], 24
          %712 = vst.msk [vmem:[%s711] sm:$0xf] %vm643, %v710
          %v714 = vunpack.c.l.b16 %v707
          %v715 = vpack.c.b16 %v714, %v714
          %716 = vrot.lane.b32.xlu0 %v715, 64
          %v717 = vpop.permute.xlu0 %716
          %s719 = scalar_lea.vmem [#allocation3], 28
          %720 = vst.msk [vmem:[%s719] sm:$0xf] %vm643, %v717
          %v722 = vunpack.c.l.b16 %v710
          %v723 = vpack.c.b16 %v722, %v722
          %724 = vrot.lane.b32.xlu0 %v723, 64
          %v725 = vpop.permute.xlu0 %724
          %s727 = scalar_lea.vmem [#allocation4], 28
          %728 = vst.msk [vmem:[%s727] sm:$0xf] %vm643, %v725
        $region52: #{tpu_custom_call.1} parent=47 // pred_fallthru
          _
        %v729 = vld [vmem:[%s311] sm:$0xff]
        %v730 = vld [vmem:[%s2] sm:$0xff]
        %v731 = vld [vmem:[%s2 + $0x8] sm:$0xff]
        %v732 = vld [vmem:[%s2 + $0x10] sm:$0xff]
        %v733 = vld [vmem:[%s2 + $0x18] sm:$0xff]
        %v734 = vld [vmem:[%s2 + $0x20] sm:$0xff]
        %v735 = vld [vmem:[%s2 + $0x28] sm:$0xff]
        %v736 = vld [vmem:[%s2 + $0x30] sm:$0xff]
        %v737 = vld [vmem:[%s2 + $0x38] sm:$0xff]
        %v738 = vld [vmem:[%s2 + $0x40] sm:$0xff]
        %v739 = vld [vmem:[%s2 + $0x48] sm:$0xff]
        %v740 = vld [vmem:[%s2 + $0x50] sm:$0xff]
        %v741 = vld [vmem:[%s2 + $0x58] sm:$0xff]
        %v742 = vld [vmem:[%s2 + $0x60] sm:$0xff]
        %v743 = vld [vmem:[%s2 + $0x68] sm:$0xff]
        %v744 = vld [vmem:[%s2 + $0x70] sm:$0xff]
        %v745 = vld [vmem:[%s2 + $0x78] sm:$0xff]
        %vm746 = vcmask 261120
        %v748 = vsel %vm746, %v729, 0
        %750 = vmatprep.subr.mxu0 0.0
        %751 = vmatpush1.msra.mxu0 0.0
        %752 = vmatprep.subr.mxu0 0.0
        %753 = vmatpush1.msra.mxu0 0.0
        %754 = vmatprep.subr.mxu0 0.0
        %755 = vmatpush1.msra.mxu0 0.0
        %756 = vmatprep.subr.mxu0 0.0
        %757 = vmatpush1.msra.mxu0 0.0
        %758 = vmatprep.subr.mxu0 0.0
        %759 = vmatpush1.msra.mxu0 0.0
        %760 = vmatprep.subr.mxu0 0.0
        %761 = vmatpush1.msra.mxu0 0.0
        %762 = vmatprep.subr.mxu0 0.0
        %763 = vmatpush1.msra.mxu0 0.0
        %764 = vmatprep.subr.mxu0 0.0
        %765 = vmatpush1.msra.mxu0 0.0
        %766 = vmatprep.subr.mxu0 0.0
        %767 = vmatpush1.msra.mxu0 0.0
        %768 = vmatprep.subr.mxu0 0.0
        %769 = vmatpush1.msra.mxu0 0.0
        %770 = vmatprep.subr.mxu0 0.0
        %771 = vmatpush1.msra.mxu0 0.0
        %772 = vmatprep.subr.mxu0 0.0
        %773 = vmatpush1.msra.mxu0 0.0
        %774 = vmatprep.subr.mxu0 %v743
        %775 = vmatpush1.msra.mxu0 %v742
        %776 = vmatprep.subr.mxu0 %v739
        %777 = vmatpush1.msra.mxu0 %v738
        %778 = vmatprep.subr.mxu0 %v735
        %779 = vmatpush1.msra.mxu0 %v734
        %780 = vmatprep.subr.mxu0 %v731
        %781 = vmatpush1.msra.mxu0 %v730
        %782 = vmatprep.subr.mxu0 0.0
        %783 = vmatpush2.msra.mxu0 0.0
        %784 = vmatprep.subr.mxu0 0.0
        %785 = vmatpush2.msra.mxu0 0.0
        %786 = vmatprep.subr.mxu0 0.0
        %787 = vmatpush2.msra.mxu0 0.0
        %788 = vmatprep.subr.mxu0 0.0
        %789 = vmatpush2.msra.mxu0 0.0
        %790 = vmatprep.subr.mxu0 0.0
        %791 = vmatpush2.msra.mxu0 0.0
        %792 = vmatprep.subr.mxu0 0.0
        %793 = vmatpush2.msra.mxu0 0.0
        %794 = vmatprep.subr.mxu0 0.0
        %795 = vmatpush2.msra.mxu0 0.0
        %796 = vmatprep.subr.mxu0 0.0
        %797 = vmatpush2.msra.mxu0 0.0
        %798 = vmatprep.subr.mxu0 0.0
        %799 = vmatpush2.msra.mxu0 0.0
        %800 = vmatprep.subr.mxu0 0.0
        %801 = vmatpush2.msra.mxu0 0.0
        %802 = vmatprep.subr.mxu0 0.0
        %803 = vmatpush2.msra.mxu0 0.0
        %804 = vmatprep.subr.mxu0 0.0
        %805 = vmatpush2.msra.mxu0 0.0
        %806 = vmatprep.subr.mxu0 0.0
        %807 = vmatpush2.msra.mxu0 0.0
        %808 = vmatprep.subr.mxu0 0.0
        %809 = vmatpush2.msra.mxu0 0.0
        %810 = vmatprep.subr.mxu0 0.0
        %811 = vmatpush2.msra.mxu0 0.0
        %812 = vmatprep.subr.mxu0 0.0
        %813 = vmatpush2.msra.mxu0 0.0
        %814 = vmatprep.mubr.f32.mxu0 0.0
        %815 = vmatmul.mubr.f32.gmra.mxu0 %v748
        %v816 = vpop.f32.mrf.mxu0
        %v817 = vadd.f32 0.0, %v816
        %v818 = vpop.f32.mrf.mxu0
        %v819 = vadd.f32 0.0, %v818
        %820 = vdwg.mxu0
        %821 = vmatprep.subr.mxu0 0.0
        %822 = vmatpush1.msra.mxu0 0.0
        %823 = vmatprep.subr.mxu0 0.0
        %824 = vmatpush1.msra.mxu0 0.0
        %825 = vmatprep.subr.mxu0 0.0
        %826 = vmatpush1.msra.mxu0 0.0
        %827 = vmatprep.subr.mxu0 0.0
        %828 = vmatpush1.msra.mxu0 0.0
        %829 = vmatprep.subr.mxu0 0.0
        %830 = vmatpush1.msra.mxu0 0.0
        %831 = vmatprep.subr.mxu0 0.0
        %832 = vmatpush1.msra.mxu0 0.0
        %833 = vmatprep.subr.mxu0 0.0
        %834 = vmatpush1.msra.mxu0 0.0
        %835 = vmatprep.subr.mxu0 0.0
        %836 = vmatpush1.msra.mxu0 0.0
        %837 = vmatprep.subr.mxu0 0.0
        %838 = vmatpush1.msra.mxu0 0.0
        %839 = vmatprep.subr.mxu0 0.0
        %840 = vmatpush1.msra.mxu0 0.0
        %841 = vmatprep.subr.mxu0 0.0
        %842 = vmatpush1.msra.mxu0 0.0
        %843 = vmatprep.subr.mxu0 0.0
        %844 = vmatpush1.msra.mxu0 0.0
        %845 = vmatprep.subr.mxu0 %v745
        %846 = vmatpush1.msra.mxu0 %v744
        %847 = vmatprep.subr.mxu0 %v741
        %848 = vmatpush1.msra.mxu0 %v740
        %849 = vmatprep.subr.mxu0 %v737
        %850 = vmatpush1.msra.mxu0 %v736
        %851 = vmatprep.subr.mxu0 %v733
        %852 = vmatpush1.msra.mxu0 %v732
        %853 = vmatprep.subr.mxu0 0.0
        %854 = vmatpush2.msra.mxu0 0.0
        %855 = vmatprep.subr.mxu0 0.0
        %856 = vmatpush2.msra.mxu0 0.0
        %857 = vmatprep.subr.mxu0 0.0
        %858 = vmatpush2.msra.mxu0 0.0
        %859 = vmatprep.subr.mxu0 0.0
        %860 = vmatpush2.msra.mxu0 0.0
        %861 = vmatprep.subr.mxu0 0.0
        %862 = vmatpush2.msra.mxu0 0.0
        %863 = vmatprep.subr.mxu0 0.0
        %864 = vmatpush2.msra.mxu0 0.0
        %865 = vmatprep.subr.mxu0 0.0
        %866 = vmatpush2.msra.mxu0 0.0
        %867 = vmatprep.subr.mxu0 0.0
        %868 = vmatpush2.msra.mxu0 0.0
        %869 = vmatprep.subr.mxu0 0.0
        %870 = vmatpush2.msra.mxu0 0.0
        %871 = vmatprep.subr.mxu0 0.0
        %872 = vmatpush2.msra.mxu0 0.0
        %873 = vmatprep.subr.mxu0 0.0
        %874 = vmatpush2.msra.mxu0 0.0
        %875 = vmatprep.subr.mxu0 0.0
        %876 = vmatpush2.msra.mxu0 0.0
        %877 = vmatprep.subr.mxu0 0.0
        %878 = vmatpush2.msra.mxu0 0.0
        %879 = vmatprep.subr.mxu0 0.0
        %880 = vmatpush2.msra.mxu0 0.0
        %881 = vmatprep.subr.mxu0 0.0
        %882 = vmatpush2.msra.mxu0 0.0
        %883 = vmatprep.subr.mxu0 0.0
        %884 = vmatpush2.msra.mxu0 0.0
        %885 = vmatprep.mubr.f32.mxu0 0.0
        %886 = vmatmul.mubr.f32.gmra.mxu0 %v748
        %v887 = vpop.f32.mrf.mxu0
        %v888 = vadd.f32 0.0, %v887
        %v889 = vpop.f32.mrf.mxu0
        %v890 = vadd.f32 0.0, %v889
        %891 = vdwg.mxu0
        %v892 = vmul.f32 %v817, 0.125
        %v893 = vmul.f32 %v819, 0.125
        %v894 = vmul.f32 %v888, 0.125
        %v895 = vmul.f32 %v890, 0.125
        %v896 = vpack.c.bf16 %v892, %v892
        %vm897 = vcmask 519168
        %898 = vst.msk [vmem:[#allocation2] sm:$0xf] %vm897, %v896
        %v900 = vunpack.c.l.b16 %v896
        %v901 = vpack.c.b16 %v900, %v900
        %902 = vrot.lane.b32.xlu0 %v901, 64
        %v903 = vpop.permute.xlu0 %902
        %s905 = scalar_lea.vmem [#allocation2], 4
        %906 = vst.msk [vmem:[%s905] sm:$0xf] %vm897, %v903
        %v907 = vpack.c.bf16 %v893, %v893
        %s908 = scalar_lea.vmem [#allocation2], 8
        %909 = vst.msk [vmem:[%s908] sm:$0xf] %vm897, %v907
        %v911 = vunpack.c.l.b16 %v907
        %v912 = vpack.c.b16 %v911, %v911
        %913 = vrot.lane.b32.xlu0 %v912, 64
        %v914 = vpop.permute.xlu0 %913
        %s916 = scalar_lea.vmem [#allocation2], 12
        %917 = vst.msk [vmem:[%s916] sm:$0xf] %vm897, %v914
        %v918 = vpack.c.bf16 %v894, %v894
        %s919 = scalar_lea.vmem [#allocation2], 16
        %920 = vst.msk [vmem:[%s919] sm:$0xf] %vm897, %v918
        %v922 = vunpack.c.l.b16 %v918
        %v923 = vpack.c.b16 %v922, %v922
        %924 = vrot.lane.b32.xlu0 %v923, 64
        %v925 = vpop.permute.xlu0 %924
        %s927 = scalar_lea.vmem [#allocation2], 20
        %928 = vst.msk [vmem:[%s927] sm:$0xf] %vm897, %v925
        %v929 = vpack.c.bf16 %v895, %v895
        %s930 = scalar_lea.vmem [#allocation2], 24
        %931 = vst.msk [vmem:[%s930] sm:$0xf] %vm897, %v929
        %v933 = vunpack.c.l.b16 %v929
        %v934 = vpack.c.b16 %v933, %v933
        %935 = vrot.lane.b32.xlu0 %v934, 64
        %v936 = vpop.permute.xlu0 %935
        %s938 = scalar_lea.vmem [#allocation2], 28
        %939 = vst.msk [vmem:[%s938] sm:$0xf] %vm897, %v936
        %v940 = vld [vmem:[#allocation2] sm:$0xf]
        %v941 = vld [vmem:[#allocation2 + $0x4] sm:$0xf]
        %v942 = vld [vmem:[#allocation2 + $0x8] sm:$0xf]
        %v943 = vld [vmem:[#allocation2 + $0xc] sm:$0xf]
        %v944 = vld [vmem:[#allocation2 + $0x10] sm:$0xf]
        %v945 = vld [vmem:[#allocation2 + $0x14] sm:$0xf]
        %v946 = vld [vmem:[#allocation2 + $0x18] sm:$0xf]
        %v947 = vld [vmem:[#allocation2 + $0x1c] sm:$0xf]
        %v948 = vld [vmem:[#allocation3] sm:$0xf]
        %v949 = vld [vmem:[#allocation3 + $0x4] sm:$0xf]
        %v950 = vld [vmem:[#allocation3 + $0x8] sm:$0xf]
        %v951 = vld [vmem:[#allocation3 + $0xc] sm:$0xf]
        %v952 = vld [vmem:[#allocation3 + $0x10] sm:$0xf]
        %v953 = vld [vmem:[#allocation3 + $0x14] sm:$0xf]
        %v954 = vld [vmem:[#allocation3 + $0x18] sm:$0xf]
        %v955 = vld [vmem:[#allocation3 + $0x1c] sm:$0xf]
        %v956 = vld [vmem:[#allocation4] sm:$0xf]
        %v957 = vld [vmem:[#allocation4 + $0x4] sm:$0xf]
        %v958 = vld [vmem:[#allocation4 + $0x8] sm:$0xf]
        %v959 = vld [vmem:[#allocation4 + $0xc] sm:$0xf]
        %v960 = vld [vmem:[#allocation4 + $0x10] sm:$0xf]
        %v961 = vld [vmem:[#allocation4 + $0x14] sm:$0xf]
        %v962 = vld [vmem:[#allocation4 + $0x18] sm:$0xf]
        %v963 = vld [vmem:[#allocation4 + $0x1c] sm:$0xf]
        %vm964 = vcmask 523264
        %v966 = vsel %vm964, %v940, 0
        %v969 = vsel %vm964, %v948, 0
        %971 = vmatprep.subr.bf16.mxu0 0
        %972 = vmatpush1.bf16.xpose.msra.mxu0 0
        %973 = vmatprep.subr.bf16.mxu0 0
        %974 = vmatpush1.bf16.xpose.msra.mxu0 0
        %975 = vmatprep.subr.bf16.mxu0 0
        %976 = vmatpush1.bf16.xpose.msra.mxu0 0
        %977 = vmatprep.subr.bf16.mxu0 0
        %978 = vmatpush1.bf16.xpose.msra.mxu0 0
        %979 = vmatprep.subr.bf16.mxu0 0
        %980 = vmatpush1.bf16.xpose.msra.mxu0 0
        %981 = vmatprep.subr.bf16.mxu0 0
        %982 = vmatpush1.bf16.xpose.msra.mxu0 0
        %983 = vmatprep.subr.bf16.mxu0 0
        %984 = vmatpush1.bf16.xpose.msra.mxu0 0
        %985 = vmatprep.subr.bf16.mxu0 0
        %986 = vmatpush1.bf16.xpose.msra.mxu0 %v969
        %987 = vmatprep.subr.bf16.mxu0 0
        %988 = vmatpush2.bf16.xpose.msra.mxu0 0
        %989 = vmatprep.subr.bf16.mxu0 0
        %990 = vmatpush2.bf16.xpose.msra.mxu0 0
        %991 = vmatprep.subr.bf16.mxu0 0
        %992 = vmatpush2.bf16.xpose.msra.mxu0 0
        %993 = vmatprep.subr.bf16.mxu0 0
        %994 = vmatpush2.bf16.xpose.msra.mxu0 0
        %995 = vmatprep.subr.bf16.mxu0 0
        %996 = vmatpush2.bf16.xpose.msra.mxu0 0
        %997 = vmatprep.subr.bf16.mxu0 0
        %998 = vmatpush2.bf16.xpose.msra.mxu0 0
        %999 = vmatprep.subr.bf16.mxu0 0
        %1000 = vmatpush2.bf16.xpose.msra.mxu0 0
        %1001 = vmatprep.subr.bf16.mxu0 0
        %1002 = vmatpush2.bf16.xpose.msra.mxu0 0
        %1003 = vmatprep.mubr.bf16.mxu0 0
        %1004 = vmatmul.mubr.bf16.gmra.mxu0 %v966
        %v1005 = vpop.f32.mrf.mxu0
        %v1006 = vadd.f32 0.0, %v1005
        %v1007 = vpop.f32.mrf.mxu0
        %v1008 = vpop.f32.mrf.mxu0
        %v1009 = vpop.f32.mrf.mxu0
        %1010 = vdwg.mxu0
        %v1012 = vsel %vm964, %v941, 0
        %v1015 = vsel %vm964, %v949, 0
        %1017 = vmatprep.subr.bf16.mxu0 0
        %1018 = vmatpush1.bf16.xpose.msra.mxu0 0
        %1019 = vmatprep.subr.bf16.mxu0 0
        %1020 = vmatpush1.bf16.xpose.msra.mxu0 0
        %1021 = vmatprep.subr.bf16.mxu0 0
        %1022 = vmatpush1.bf16.xpose.msra.mxu0 0
        %1023 = vmatprep.subr.bf16.mxu0 0
        %1024 = vmatpush1.bf16.xpose.msra.mxu0 0
        %1025 = vmatprep.subr.bf16.mxu0 0
        %1026 = vmatpush1.bf16.xpose.msra.mxu0 0
        %1027 = vmatprep.subr.bf16.mxu0 0
        %1028 = vmatpush1.bf16.xpose.msra.mxu0 0
        %1029 = vmatprep.subr.bf16.mxu0 0
        %1030 = vmatpush1.bf16.xpose.msra.mxu0 0
        %1031 = vmatprep.subr.bf16.mxu0 0
        %1032 = vmatpush1.bf16.xpose.msra.mxu0 %v1015
        %1033 = vmatprep.subr.bf16.mxu0 0
        %1034 = vmatpush2.bf16.xpose.msra.mxu0 0
        %1035 = vmatprep.subr.bf16.mxu0 0
        %1036 = vmatpush2.bf16.xpose.msra.mxu0 0
        %1037 = vmatprep.subr.bf16.mxu0 0
        %1038 = vmatpush2.bf16.xpose.msra.mxu0 0
        %1039 = vmatprep.subr.bf16.mxu0 0
        %1040 = vmatpush2.bf16.xpose.msra.mxu0 0
        %1041 = vmatprep.subr.bf16.mxu0 0
        %1042 = vmatpush2.bf16.xpose.msra.mxu0 0
        %1043 = vmatprep.subr.bf16.mxu0 0
        %1044 = vmatpush2.bf16.xpose.msra.mxu0 0
        %1045 = vmatprep.subr.bf16.mxu0 0
        %1046 = vmatpush2.bf16.xpose.msra.mxu0 0
        %1047 = vmatprep.subr.bf16.mxu0 0
        %1048 = vmatpush2.bf16.xpose.msra.mxu0 0
        %1049 = vmatprep.mubr.bf16.mxu0 0
        %1050 = vmatmul.mubr.bf16.gmra.mxu0 %v1012
        %v1051 = vpop.f32.mrf.mxu0
        %v1052 = vadd.f32 0.0, %v1051
        %v1053 = vpop.f32.mrf.mxu0
        %v1054 = vpop.f32.mrf.mxu0
        %v1055 = vpop.f32.mrf.mxu0
        %1056 = vdwg.mxu0
        %v1058 = vsel %vm964, %v942, 0
        %v1061 = vsel %vm964, %v950, 0
        %1063 = vmatprep.subr.bf16.mxu0 0
        %1064 = vmatpush1.bf16.xpose.msra.mxu0 0
        %1065 = vmatprep.subr.bf16.mxu0 0
        %1066 = vmatpush1.bf16.xpose.msra.mxu0 0
        %1067 = vmatprep.subr.bf16.mxu0 0
        %1068 = vmatpush1.bf16.xpose.msra.mxu0 0
        %1069 = vmatprep.subr.bf16.mxu0 0
        %1070 = vmatpush1.bf16.xpose.msra.mxu0 0
        %1071 = vmatprep.subr.bf16.mxu0 0
        %1072 = vmatpush1.bf16.xpose.msra.mxu0 0
        %1073 = vmatprep.subr.bf16.mxu0 0
        %1074 = vmatpush1.bf16.xpose.msra.mxu0 0
        %1075 = vmatprep.subr.bf16.mxu0 0
        %1076 = vmatpush1.bf16.xpose.msra.mxu0 0
        %1077 = vmatprep.subr.bf16.mxu0 0
        %1078 = vmatpush1.bf16.xpose.msra.mxu0 %v1061
        %1079 = vmatprep.subr.bf16.mxu0 0
        %1080 = vmatpush2.bf16.xpose.msra.mxu0 0
        %1081 = vmatprep.subr.bf16.mxu0 0
        %1082 = vmatpush2.bf16.xpose.msra.mxu0 0
        %1083 = vmatprep.subr.bf16.mxu0 0
        %1084 = vmatpush2.bf16.xpose.msra.mxu0 0
        %1085 = vmatprep.subr.bf16.mxu0 0
        %1086 = vmatpush2.bf16.xpose.msra.mxu0 0
        %1087 = vmatprep.subr.bf16.mxu0 0
        %1088 = vmatpush2.bf16.xpose.msra.mxu0 0
        %1089 = vmatprep.subr.bf16.mxu0 0
        %1090 = vmatpush2.bf16.xpose.msra.mxu0 0
        %1091 = vmatprep.subr.bf16.mxu0 0
        %1092 = vmatpush2.bf16.xpose.msra.mxu0 0
        %1093 = vmatprep.subr.bf16.mxu0 0
        %1094 = vmatpush2.bf16.xpose.msra.mxu0 0
        %1095 = vmatprep.mubr.bf16.mxu0 0
        %1096 = vmatmul.mubr.bf16.gmra.mxu0 %v1058
        %v1097 = vpop.f32.mrf.mxu0
        %v1098 = vadd.f32 0.0, %v1097
        %v1099 = vpop.f32.mrf.mxu0
        %v1100 = vpop.f32.mrf.mxu0
        %v1101 = vpop.f32.mrf.mxu0
        %1102 = vdwg.mxu0
        %v1104 = vsel %vm964, %v943, 0
        %v1107 = vsel %vm964, %v951, 0
        %1109 = vmatprep.subr.bf16.mxu0 0
        %1110 = vmatpush1.bf16.xpose.msra.mxu0 0
        %1111 = vmatprep.subr.bf16.mxu0 0
        %1112 = vmatpush1.bf16.xpose.msra.mxu0 0
        %1113 = vmatprep.subr.bf16.mxu0 0
        %1114 = vmatpush1.bf16.xpose.msra.mxu0 0
        %1115 = vmatprep.subr.bf16.mxu0 0
        %1116 = vmatpush1.bf16.xpose.msra.mxu0 0
        %1117 = vmatprep.subr.bf16.mxu0 0
        %1118 = vmatpush1.bf16.xpose.msra.mxu0 0
        %1119 = vmatprep.subr.bf16.mxu0 0
        %1120 = vmatpush1.bf16.xpose.msra.mxu0 0
        %1121 = vmatprep.subr.bf16.mxu0 0
        %1122 = vmatpush1.bf16.xpose.msra.mxu0 0
        %1123 = vmatprep.subr.bf16.mxu0 0
        %1124 = vmatpush1.bf16.xpose.msra.mxu0 %v1107
        %1125 = vmatprep.subr.bf16.mxu0 0
        %1126 = vmatpush2.bf16.xpose.msra.mxu0 0
        %1127 = vmatprep.subr.bf16.mxu0 0
        %1128 = vmatpush2.bf16.xpose.msra.mxu0 0
        %1129 = vmatprep.subr.bf16.mxu0 0
        %1130 = vmatpush2.bf16.xpose.msra.mxu0 0
        %1131 = vmatprep.subr.bf16.mxu0 0
        %1132 = vmatpush2.bf16.xpose.msra.mxu0 0
        %1133 = vmatprep.subr.bf16.mxu0 0
        %1134 = vmatpush2.bf16.xpose.msra.mxu0 0
        %1135 = vmatprep.subr.bf16.mxu0 0
        %1136 = vmatpush2.bf16.xpose.msra.mxu0 0
        %1137 = vmatprep.subr.bf16.mxu0 0
        %1138 = vmatpush2.bf16.xpose.msra.mxu0 0
        %1139 = vmatprep.subr.bf16.mxu0 0
        %1140 = vmatpush2.bf16.xpose.msra.mxu0 0
        %1141 = vmatprep.mubr.bf16.mxu0 0
        %1142 = vmatmul.mubr.bf16.gmra.mxu0 %v1104
        %v1143 = vpop.f32.mrf.mxu0
        %v1144 = vadd.f32 0.0, %v1143
        %v1145 = vpop.f32.mrf.mxu0
        %v1146 = vpop.f32.mrf.mxu0
        %v1147 = vpop.f32.mrf.mxu0
        %1148 = vdwg.mxu0
        %v1150 = vsel %vm964, %v944, 0
        %v1153 = vsel %vm964, %v952, 0
        %1155 = vmatprep.subr.bf16.mxu0 0
        %1156 = vmatpush1.bf16.xpose.msra.mxu0 0
        %1157 = vmatprep.subr.bf16.mxu0 0
        %1158 = vmatpush1.bf16.xpose.msra.mxu0 0
        %1159 = vmatprep.subr.bf16.mxu0 0
        %1160 = vmatpush1.bf16.xpose.msra.mxu0 0
        %1161 = vmatprep.subr.bf16.mxu0 0
        %1162 = vmatpush1.bf16.xpose.msra.mxu0 0
        %1163 = vmatprep.subr.bf16.mxu0 0
        %1164 = vmatpush1.bf16.xpose.msra.mxu0 0
        %1165 = vmatprep.subr.bf16.mxu0 0
        %1166 = vmatpush1.bf16.xpose.msra.mxu0 0
        %1167 = vmatprep.subr.bf16.mxu0 0
        %1168 = vmatpush1.bf16.xpose.msra.mxu0 0
        %1169 = vmatprep.subr.bf16.mxu0 0
        %1170 = vmatpush1.bf16.xpose.msra.mxu0 %v1153
        %1171 = vmatprep.subr.bf16.mxu0 0
        %1172 = vmatpush2.bf16.xpose.msra.mxu0 0
        %1173 = vmatprep.subr.bf16.mxu0 0
        %1174 = vmatpush2.bf16.xpose.msra.mxu0 0
        %1175 = vmatprep.subr.bf16.mxu0 0
        %1176 = vmatpush2.bf16.xpose.msra.mxu0 0
        %1177 = vmatprep.subr.bf16.mxu0 0
        %1178 = vmatpush2.bf16.xpose.msra.mxu0 0
        %1179 = vmatprep.subr.bf16.mxu0 0
        %1180 = vmatpush2.bf16.xpose.msra.mxu0 0
        %1181 = vmatprep.subr.bf16.mxu0 0
        %1182 = vmatpush2.bf16.xpose.msra.mxu0 0
        %1183 = vmatprep.subr.bf16.mxu0 0
        %1184 = vmatpush2.bf16.xpose.msra.mxu0 0
        %1185 = vmatprep.subr.bf16.mxu0 0
        %1186 = vmatpush2.bf16.xpose.msra.mxu0 0
        %1187 = vmatprep.mubr.bf16.mxu0 0
        %1188 = vmatmul.mubr.bf16.gmra.mxu0 %v1150
        %v1189 = vpop.f32.mrf.mxu0
        %v1190 = vadd.f32 0.0, %v1189
        %v1191 = vpop.f32.mrf.mxu0
        %v1192 = vpop.f32.mrf.mxu0
        %v1193 = vpop.f32.mrf.mxu0
        %1194 = vdwg.mxu0
        %v1196 = vsel %vm964, %v945, 0
        %v1199 = vsel %vm964, %v953, 0
        %1201 = vmatprep.subr.bf16.mxu0 0
        %1202 = vmatpush1.bf16.xpose.msra.mxu0 0
        %1203 = vmatprep.subr.bf16.mxu0 0
        %1204 = vmatpush1.bf16.xpose.msra.mxu0 0
        %1205 = vmatprep.subr.bf16.mxu0 0
        %1206 = vmatpush1.bf16.xpose.msra.mxu0 0
        %1207 = vmatprep.subr.bf16.mxu0 0
        %1208 = vmatpush1.bf16.xpose.msra.mxu0 0
        %1209 = vmatprep.subr.bf16.mxu0 0
        %1210 = vmatpush1.bf16.xpose.msra.mxu0 0
        %1211 = vmatprep.subr.bf16.mxu0 0
        %1212 = vmatpush1.bf16.xpose.msra.mxu0 0
        %1213 = vmatprep.subr.bf16.mxu0 0
        %1214 = vmatpush1.bf16.xpose.msra.mxu0 0
        %1215 = vmatprep.subr.bf16.mxu0 0
        %1216 = vmatpush1.bf16.xpose.msra.mxu0 %v1199
        %1217 = vmatprep.subr.bf16.mxu0 0
        %1218 = vmatpush2.bf16.xpose.msra.mxu0 0
        %1219 = vmatprep.subr.bf16.mxu0 0
        %1220 = vmatpush2.bf16.xpose.msra.mxu0 0
        %1221 = vmatprep.subr.bf16.mxu0 0
        %1222 = vmatpush2.bf16.xpose.msra.mxu0 0
        %1223 = vmatprep.subr.bf16.mxu0 0
        %1224 = vmatpush2.bf16.xpose.msra.mxu0 0
        %1225 = vmatprep.subr.bf16.mxu0 0
        %1226 = vmatpush2.bf16.xpose.msra.mxu0 0
        %1227 = vmatprep.subr.bf16.mxu0 0
        %1228 = vmatpush2.bf16.xpose.msra.mxu0 0
        %1229 = vmatprep.subr.bf16.mxu0 0
        %1230 = vmatpush2.bf16.xpose.msra.mxu0 0
        %1231 = vmatprep.subr.bf16.mxu0 0
        %1232 = vmatpush2.bf16.xpose.msra.mxu0 0
        %1233 = vmatprep.mubr.bf16.mxu0 0
        %1234 = vmatmul.mubr.bf16.gmra.mxu0 %v1196
        %v1235 = vpop.f32.mrf.mxu0
        %v1236 = vadd.f32 0.0, %v1235
        %v1237 = vpop.f32.mrf.mxu0
        %v1238 = vpop.f32.mrf.mxu0
        %v1239 = vpop.f32.mrf.mxu0
        %1240 = vdwg.mxu0
        %v1242 = vsel %vm964, %v946, 0
        %v1245 = vsel %vm964, %v954, 0
        %1247 = vmatprep.subr.bf16.mxu0 0
        %1248 = vmatpush1.bf16.xpose.msra.mxu0 0
        %1249 = vmatprep.subr.bf16.mxu0 0
        %1250 = vmatpush1.bf16.xpose.msra.mxu0 0
        %1251 = vmatprep.subr.bf16.mxu0 0
        %1252 = vmatpush1.bf16.xpose.msra.mxu0 0
        %1253 = vmatprep.subr.bf16.mxu0 0
        %1254 = vmatpush1.bf16.xpose.msra.mxu0 0
        %1255 = vmatprep.subr.bf16.mxu0 0
        %1256 = vmatpush1.bf16.xpose.msra.mxu0 0
        %1257 = vmatprep.subr.bf16.mxu0 0
        %1258 = vmatpush1.bf16.xpose.msra.mxu0 0
        %1259 = vmatprep.subr.bf16.mxu0 0
        %1260 = vmatpush1.bf16.xpose.msra.mxu0 0
        %1261 = vmatprep.subr.bf16.mxu0 0
        %1262 = vmatpush1.bf16.xpose.msra.mxu0 %v1245
        %1263 = vmatprep.subr.bf16.mxu0 0
        %1264 = vmatpush2.bf16.xpose.msra.mxu0 0
        %1265 = vmatprep.subr.bf16.mxu0 0
        %1266 = vmatpush2.bf16.xpose.msra.mxu0 0
        %1267 = vmatprep.subr.bf16.mxu0 0
        %1268 = vmatpush2.bf16.xpose.msra.mxu0 0
        %1269 = vmatprep.subr.bf16.mxu0 0
        %1270 = vmatpush2.bf16.xpose.msra.mxu0 0
        %1271 = vmatprep.subr.bf16.mxu0 0
        %1272 = vmatpush2.bf16.xpose.msra.mxu0 0
        %1273 = vmatprep.subr.bf16.mxu0 0
        %1274 = vmatpush2.bf16.xpose.msra.mxu0 0
        %1275 = vmatprep.subr.bf16.mxu0 0
        %1276 = vmatpush2.bf16.xpose.msra.mxu0 0
        %1277 = vmatprep.subr.bf16.mxu0 0
        %1278 = vmatpush2.bf16.xpose.msra.mxu0 0
        %1279 = vmatprep.mubr.bf16.mxu0 0
        %1280 = vmatmul.mubr.bf16.gmra.mxu0 %v1242
        %v1281 = vpop.f32.mrf.mxu0
        %v1282 = vadd.f32 0.0, %v1281
        %v1283 = vpop.f32.mrf.mxu0
        %v1284 = vpop.f32.mrf.mxu0
        %v1285 = vpop.f32.mrf.mxu0
        %1286 = vdwg.mxu0
        %v1288 = vsel %vm964, %v947, 0
        %v1291 = vsel %vm964, %v955, 0
        %1293 = vmatprep.subr.bf16.mxu0 0
        %1294 = vmatpush1.bf16.xpose.msra.mxu0 0
        %1295 = vmatprep.subr.bf16.mxu0 0
        %1296 = vmatpush1.bf16.xpose.msra.mxu0 0
        %1297 = vmatprep.subr.bf16.mxu0 0
        %1298 = vmatpush1.bf16.xpose.msra.mxu0 0
        %1299 = vmatprep.subr.bf16.mxu0 0
        %1300 = vmatpush1.bf16.xpose.msra.mxu0 0
        %1301 = vmatprep.subr.bf16.mxu0 0
        %1302 = vmatpush1.bf16.xpose.msra.mxu0 0
        %1303 = vmatprep.subr.bf16.mxu0 0
        %1304 = vmatpush1.bf16.xpose.msra.mxu0 0
        %1305 = vmatprep.subr.bf16.mxu0 0
        %1306 = vmatpush1.bf16.xpose.msra.mxu0 0
        %1307 = vmatprep.subr.bf16.mxu0 0
        %1308 = vmatpush1.bf16.xpose.msra.mxu0 %v1291
        %1309 = vmatprep.subr.bf16.mxu0 0
        %1310 = vmatpush2.bf16.xpose.msra.mxu0 0
        %1311 = vmatprep.subr.bf16.mxu0 0
        %1312 = vmatpush2.bf16.xpose.msra.mxu0 0
        %1313 = vmatprep.subr.bf16.mxu0 0
        %1314 = vmatpush2.bf16.xpose.msra.mxu0 0
        %1315 = vmatprep.subr.bf16.mxu0 0
        %1316 = vmatpush2.bf16.xpose.msra.mxu0 0
        %1317 = vmatprep.subr.bf16.mxu0 0
        %1318 = vmatpush2.bf16.xpose.msra.mxu0 0
        %1319 = vmatprep.subr.bf16.mxu0 0
        %1320 = vmatpush2.bf16.xpose.msra.mxu0 0
        %1321 = vmatprep.subr.bf16.mxu0 0
        %1322 = vmatpush2.bf16.xpose.msra.mxu0 0
        %1323 = vmatprep.subr.bf16.mxu0 0
        %1324 = vmatpush2.bf16.xpose.msra.mxu0 0
        %1325 = vmatprep.mubr.bf16.mxu0 0
        %1326 = vmatmul.mubr.bf16.gmra.mxu0 %v1288
        %v1327 = vpop.f32.mrf.mxu0
        %v1328 = vadd.f32 0.0, %v1327
        %v1329 = vpop.f32.mrf.mxu0
        %v1330 = vpop.f32.mrf.mxu0
        %v1331 = vpop.f32.mrf.mxu0
        %1332 = vdwg.mxu0
        %vm1333 = vcmask 64512
        %v1334 = vsel %vm1333, %v1006, -inf
        %1335 = vmax.xlane.f32.xlu0 %v1334
        %v1336 = vpop.xlane.xlu0 %1335
        %v1337 = vsel %vm1333, %v1052, -inf
        %1338 = vmax.xlane.f32.xlu0 %v1337
        %v1339 = vpop.xlane.xlu0 %1338
        %v1340 = vsel %vm1333, %v1098, -inf
        %1341 = vmax.xlane.f32.xlu0 %v1340
        %v1342 = vpop.xlane.xlu0 %1341
        %v1343 = vsel %vm1333, %v1144, -inf
        %1344 = vmax.xlane.f32.xlu0 %v1343
        %v1345 = vpop.xlane.xlu0 %1344
        %v1346 = vsel %vm1333, %v1190, -inf
        %1347 = vmax.xlane.f32.xlu0 %v1346
        %v1348 = vpop.xlane.xlu0 %1347
        %v1349 = vsel %vm1333, %v1236, -inf
        %1350 = vmax.xlane.f32.xlu0 %v1349
        %v1351 = vpop.xlane.xlu0 %1350
        %v1352 = vsel %vm1333, %v1282, -inf
        %1353 = vmax.xlane.f32.xlu0 %v1352
        %v1354 = vpop.xlane.xlu0 %1353
        %v1355 = vsel %vm1333, %v1328, -inf
        %1356 = vmax.xlane.f32.xlu0 %v1355
        %v1357 = vpop.xlane.xlu0 %1356
        %v1358 = vsub.f32 %v1006, %v1336
        %v1359 = vsub.f32 %v1052, %v1339
        %v1360 = vsub.f32 %v1098, %v1342
        %v1361 = vsub.f32 %v1144, %v1345
        %v1362 = vsub.f32 %v1190, %v1348
        %v1363 = vsub.f32 %v1236, %v1351
        %v1364 = vsub.f32 %v1282, %v1354
        %v1365 = vsub.f32 %v1328, %v1357
        %v1366 = vmul.f32 %v1358, 1.442695
        %v1367 = vpow.pop %v1366
        %v1368 = vmul.f32 %v1359, 1.442695
        %v1369 = vpow.pop %v1368
        %v1370 = vmul.f32 %v1360, 1.442695
        %v1371 = vpow.pop %v1370
        %v1372 = vmul.f32 %v1361, 1.442695
        %v1373 = vpow.pop %v1372
        %v1374 = vmul.f32 %v1362, 1.442695
        %v1375 = vpow.pop %v1374
        %v1376 = vmul.f32 %v1363, 1.442695
        %v1377 = vpow.pop %v1376
        %v1378 = vmul.f32 %v1364, 1.442695
        %v1379 = vpow.pop %v1378
        %v1380 = vmul.f32 %v1365, 1.442695
        %v1381 = vpow.pop %v1380
        %v1382 = vsel %vm1333, %v1367, 0.0
        %1383 = vadd.xlane.f32.xlu0 %v1382
        %v1384 = vpop.xlane.xlu0 %1383
        %v1385 = vsel %vm1333, %v1369, 0.0
        %1386 = vadd.xlane.f32.xlu0 %v1385
        %v1387 = vpop.xlane.xlu0 %1386
        %v1388 = vsel %vm1333, %v1371, 0.0
        %1389 = vadd.xlane.f32.xlu0 %v1388
        %v1390 = vpop.xlane.xlu0 %1389
        %v1391 = vsel %vm1333, %v1373, 0.0
        %1392 = vadd.xlane.f32.xlu0 %v1391
        %v1393 = vpop.xlane.xlu0 %1392
        %v1394 = vsel %vm1333, %v1375, 0.0
        %1395 = vadd.xlane.f32.xlu0 %v1394
        %v1396 = vpop.xlane.xlu0 %1395
        %v1397 = vsel %vm1333, %v1377, 0.0
        %1398 = vadd.xlane.f32.xlu0 %v1397
        %v1399 = vpop.xlane.xlu0 %1398
        %v1400 = vsel %vm1333, %v1379, 0.0
        %1401 = vadd.xlane.f32.xlu0 %v1400
        %v1402 = vpop.xlane.xlu0 %1401
        %v1403 = vsel %vm1333, %v1381, 0.0
        %1404 = vadd.xlane.f32.xlu0 %v1403
        %v1405 = vpop.xlane.xlu0 %1404
        %v1406 = vrcp.pop %v1384
        %v1407 = vrcp.pop %v1387
        %v1408 = vrcp.pop %v1390
        %v1409 = vrcp.pop %v1393
        %v1410 = vrcp.pop %v1396
        %v1411 = vrcp.pop %v1399
        %v1412 = vrcp.pop %v1402
        %v1413 = vrcp.pop %v1405
        %v1414 = vmul.f32 %v1367, %v1406
        %v1415 = vmul.f32 %v1369, %v1407
        %v1416 = vmul.f32 %v1371, %v1408
        %v1417 = vmul.f32 %v1373, %v1409
        %v1418 = vmul.f32 %v1375, %v1410
        %v1419 = vmul.f32 %v1377, %v1411
        %v1420 = vmul.f32 %v1379, %v1412
        %v1421 = vmul.f32 %v1381, %v1413
        %v1422 = vpack.c.bf16 %v1414, %v1414
        %v1423 = vpack.c.bf16 %v1415, %v1415
        %v1424 = vpack.c.bf16 %v1416, %v1416
        %v1425 = vpack.c.bf16 %v1417, %v1417
        %v1426 = vpack.c.bf16 %v1418, %v1418
        %v1427 = vpack.c.bf16 %v1419, %v1419
        %v1428 = vpack.c.bf16 %v1420, %v1420
        %v1429 = vpack.c.bf16 %v1421, %v1421
        %v1431 = vsel %vm1333, %v1422, 0
        %vm1433 = vcmask 1043456
        %v1435 = vsel %vm1433, %v956, 0
        %1437 = vmatprep.subr.bf16.mxu0 0
        %1438 = vmatpush1.bf16.msra.mxu0 0
        %1439 = vmatprep.subr.bf16.mxu0 0
        %1440 = vmatpush1.bf16.msra.mxu0 0
        %1441 = vmatprep.subr.bf16.mxu0 0
        %1442 = vmatpush1.bf16.msra.mxu0 0
        %1443 = vmatprep.subr.bf16.mxu0 0
        %1444 = vmatpush1.bf16.msra.mxu0 0
        %1445 = vmatprep.subr.bf16.mxu0 0
        %1446 = vmatpush1.bf16.msra.mxu0 0
        %1447 = vmatprep.subr.bf16.mxu0 0
        %1448 = vmatpush1.bf16.msra.mxu0 0
        %1449 = vmatprep.subr.bf16.mxu0 0
        %1450 = vmatpush1.bf16.msra.mxu0 0
        %1451 = vmatprep.subr.bf16.mxu0 0
        %1452 = vmatpush1.bf16.msra.mxu0 %v1435
        %1453 = vmatprep.subr.bf16.mxu0 0
        %1454 = vmatpush2.bf16.msra.mxu0 0
        %1455 = vmatprep.subr.bf16.mxu0 0
        %1456 = vmatpush2.bf16.msra.mxu0 0
        %1457 = vmatprep.subr.bf16.mxu0 0
        %1458 = vmatpush2.bf16.msra.mxu0 0
        %1459 = vmatprep.subr.bf16.mxu0 0
        %1460 = vmatpush2.bf16.msra.mxu0 0
        %1461 = vmatprep.subr.bf16.mxu0 0
        %1462 = vmatpush2.bf16.msra.mxu0 0
        %1463 = vmatprep.subr.bf16.mxu0 0
        %1464 = vmatpush2.bf16.msra.mxu0 0
        %1465 = vmatprep.subr.bf16.mxu0 0
        %1466 = vmatpush2.bf16.msra.mxu0 0
        %1467 = vmatprep.subr.bf16.mxu0 0
        %1468 = vmatpush2.bf16.msra.mxu0 0
        %1469 = vmatprep.mubr.bf16.mxu0 0
        %1470 = vmatmul.mubr.bf16.gmra.mxu0 %v1431
        %v1471 = vpop.f32.mrf.mxu0
        %v1472 = vadd.f32 0.0, %v1471
        %v1473 = vpop.f32.mrf.mxu0
        %v1474 = vpop.f32.mrf.mxu0
        %v1475 = vpop.f32.mrf.mxu0
        %1476 = vdwg.mxu0
        %v1478 = vsel %vm1333, %v1423, 0
        %v1481 = vsel %vm1433, %v957, 0
        %1483 = vmatprep.subr.bf16.mxu0 0
        %1484 = vmatpush1.bf16.msra.mxu0 0
        %1485 = vmatprep.subr.bf16.mxu0 0
        %1486 = vmatpush1.bf16.msra.mxu0 0
        %1487 = vmatprep.subr.bf16.mxu0 0
        %1488 = vmatpush1.bf16.msra.mxu0 0
        %1489 = vmatprep.subr.bf16.mxu0 0
        %1490 = vmatpush1.bf16.msra.mxu0 0
        %1491 = vmatprep.subr.bf16.mxu0 0
        %1492 = vmatpush1.bf16.msra.mxu0 0
        %1493 = vmatprep.subr.bf16.mxu0 0
        %1494 = vmatpush1.bf16.msra.mxu0 0
        %1495 = vmatprep.subr.bf16.mxu0 0
        %1496 = vmatpush1.bf16.msra.mxu0 0
        %1497 = vmatprep.subr.bf16.mxu0 0
        %1498 = vmatpush1.bf16.msra.mxu0 %v1481
        %1499 = vmatprep.subr.bf16.mxu0 0
        %1500 = vmatpush2.bf16.msra.mxu0 0
        %1501 = vmatprep.subr.bf16.mxu0 0
        %1502 = vmatpush2.bf16.msra.mxu0 0
        %1503 = vmatprep.subr.bf16.mxu0 0
        %1504 = vmatpush2.bf16.msra.mxu0 0
        %1505 = vmatprep.subr.bf16.mxu0 0
        %1506 = vmatpush2.bf16.msra.mxu0 0
        %1507 = vmatprep.subr.bf16.mxu0 0
        %1508 = vmatpush2.bf16.msra.mxu0 0
        %1509 = vmatprep.subr.bf16.mxu0 0
        %1510 = vmatpush2.bf16.msra.mxu0 0
        %1511 = vmatprep.subr.bf16.mxu0 0
        %1512 = vmatpush2.bf16.msra.mxu0 0
        %1513 = vmatprep.subr.bf16.mxu0 0
        %1514 = vmatpush2.bf16.msra.mxu0 0
        %1515 = vmatprep.mubr.bf16.mxu0 0
        %1516 = vmatmul.mubr.bf16.gmra.mxu0 %v1478
        %v1517 = vpop.f32.mrf.mxu0
        %v1518 = vadd.f32 0.0, %v1517
        %v1519 = vpop.f32.mrf.mxu0
        %v1520 = vpop.f32.mrf.mxu0
        %v1521 = vpop.f32.mrf.mxu0
        %1522 = vdwg.mxu0
        %v1524 = vsel %vm1333, %v1424, 0
        %v1527 = vsel %vm1433, %v958, 0
        %1529 = vmatprep.subr.bf16.mxu0 0
        %1530 = vmatpush1.bf16.msra.mxu0 0
        %1531 = vmatprep.subr.bf16.mxu0 0
        %1532 = vmatpush1.bf16.msra.mxu0 0
        %1533 = vmatprep.subr.bf16.mxu0 0
        %1534 = vmatpush1.bf16.msra.mxu0 0
        %1535 = vmatprep.subr.bf16.mxu0 0
        %1536 = vmatpush1.bf16.msra.mxu0 0
        %1537 = vmatprep.subr.bf16.mxu0 0
        %1538 = vmatpush1.bf16.msra.mxu0 0
        %1539 = vmatprep.subr.bf16.mxu0 0
        %1540 = vmatpush1.bf16.msra.mxu0 0
        %1541 = vmatprep.subr.bf16.mxu0 0
        %1542 = vmatpush1.bf16.msra.mxu0 0
        %1543 = vmatprep.subr.bf16.mxu0 0
        %1544 = vmatpush1.bf16.msra.mxu0 %v1527
        %1545 = vmatprep.subr.bf16.mxu0 0
        %1546 = vmatpush2.bf16.msra.mxu0 0
        %1547 = vmatprep.subr.bf16.mxu0 0
        %1548 = vmatpush2.bf16.msra.mxu0 0
        %1549 = vmatprep.subr.bf16.mxu0 0
        %1550 = vmatpush2.bf16.msra.mxu0 0
        %1551 = vmatprep.subr.bf16.mxu0 0
        %1552 = vmatpush2.bf16.msra.mxu0 0
        %1553 = vmatprep.subr.bf16.mxu0 0
        %1554 = vmatpush2.bf16.msra.mxu0 0
        %1555 = vmatprep.subr.bf16.mxu0 0
        %1556 = vmatpush2.bf16.msra.mxu0 0
        %1557 = vmatprep.subr.bf16.mxu0 0
        %1558 = vmatpush2.bf16.msra.mxu0 0
        %1559 = vmatprep.subr.bf16.mxu0 0
        %1560 = vmatpush2.bf16.msra.mxu0 0
        %1561 = vmatprep.mubr.bf16.mxu0 0
        %1562 = vmatmul.mubr.bf16.gmra.mxu0 %v1524
        %v1563 = vpop.f32.mrf.mxu0
        %v1564 = vadd.f32 0.0, %v1563
        %v1565 = vpop.f32.mrf.mxu0
        %v1566 = vpop.f32.mrf.mxu0
        %v1567 = vpop.f32.mrf.mxu0
        %1568 = vdwg.mxu0
        %v1570 = vsel %vm1333, %v1425, 0
        %v1573 = vsel %vm1433, %v959, 0
        %1575 = vmatprep.subr.bf16.mxu0 0
        %1576 = vmatpush1.bf16.msra.mxu0 0
        %1577 = vmatprep.subr.bf16.mxu0 0
        %1578 = vmatpush1.bf16.msra.mxu0 0
        %1579 = vmatprep.subr.bf16.mxu0 0
        %1580 = vmatpush1.bf16.msra.mxu0 0
        %1581 = vmatprep.subr.bf16.mxu0 0
        %1582 = vmatpush1.bf16.msra.mxu0 0
        %1583 = vmatprep.subr.bf16.mxu0 0
        %1584 = vmatpush1.bf16.msra.mxu0 0
        %1585 = vmatprep.subr.bf16.mxu0 0
        %1586 = vmatpush1.bf16.msra.mxu0 0
        %1587 = vmatprep.subr.bf16.mxu0 0
        %1588 = vmatpush1.bf16.msra.mxu0 0
        %1589 = vmatprep.subr.bf16.mxu0 0
        %1590 = vmatpush1.bf16.msra.mxu0 %v1573
        %1591 = vmatprep.subr.bf16.mxu0 0
        %1592 = vmatpush2.bf16.msra.mxu0 0
        %1593 = vmatprep.subr.bf16.mxu0 0
        %1594 = vmatpush2.bf16.msra.mxu0 0
        %1595 = vmatprep.subr.bf16.mxu0 0
        %1596 = vmatpush2.bf16.msra.mxu0 0
        %1597 = vmatprep.subr.bf16.mxu0 0
        %1598 = vmatpush2.bf16.msra.mxu0 0
        %1599 = vmatprep.subr.bf16.mxu0 0
        %1600 = vmatpush2.bf16.msra.mxu0 0
        %1601 = vmatprep.subr.bf16.mxu0 0
        %1602 = vmatpush2.bf16.msra.mxu0 0
        %1603 = vmatprep.subr.bf16.mxu0 0
        %1604 = vmatpush2.bf16.msra.mxu0 0
        %1605 = vmatprep.subr.bf16.mxu0 0
        %1606 = vmatpush2.bf16.msra.mxu0 0
        %1607 = vmatprep.mubr.bf16.mxu0 0
        %1608 = vmatmul.mubr.bf16.gmra.mxu0 %v1570
        %v1609 = vpop.f32.mrf.mxu0
        %v1610 = vadd.f32 0.0, %v1609
        %v1611 = vpop.f32.mrf.mxu0
        %v1612 = vpop.f32.mrf.mxu0
        %v1613 = vpop.f32.mrf.mxu0
        %1614 = vdwg.mxu0
        %v1616 = vsel %vm1333, %v1426, 0
        %v1619 = vsel %vm1433, %v960, 0
        %1621 = vmatprep.subr.bf16.mxu0 0
        %1622 = vmatpush1.bf16.msra.mxu0 0
        %1623 = vmatprep.subr.bf16.mxu0 0
        %1624 = vmatpush1.bf16.msra.mxu0 0
        %1625 = vmatprep.subr.bf16.mxu0 0
        %1626 = vmatpush1.bf16.msra.mxu0 0
        %1627 = vmatprep.subr.bf16.mxu0 0
        %1628 = vmatpush1.bf16.msra.mxu0 0
        %1629 = vmatprep.subr.bf16.mxu0 0
        %1630 = vmatpush1.bf16.msra.mxu0 0
        %1631 = vmatprep.subr.bf16.mxu0 0
        %1632 = vmatpush1.bf16.msra.mxu0 0
        %1633 = vmatprep.subr.bf16.mxu0 0
        %1634 = vmatpush1.bf16.msra.mxu0 0
        %1635 = vmatprep.subr.bf16.mxu0 0
        %1636 = vmatpush1.bf16.msra.mxu0 %v1619
        %1637 = vmatprep.subr.bf16.mxu0 0
        %1638 = vmatpush2.bf16.msra.mxu0 0
        %1639 = vmatprep.subr.bf16.mxu0 0
        %1640 = vmatpush2.bf16.msra.mxu0 0
        %1641 = vmatprep.subr.bf16.mxu0 0
        %1642 = vmatpush2.bf16.msra.mxu0 0
        %1643 = vmatprep.subr.bf16.mxu0 0
        %1644 = vmatpush2.bf16.msra.mxu0 0
        %1645 = vmatprep.subr.bf16.mxu0 0
        %1646 = vmatpush2.bf16.msra.mxu0 0
        %1647 = vmatprep.subr.bf16.mxu0 0
        %1648 = vmatpush2.bf16.msra.mxu0 0
        %1649 = vmatprep.subr.bf16.mxu0 0
        %1650 = vmatpush2.bf16.msra.mxu0 0
        %1651 = vmatprep.subr.bf16.mxu0 0
        %1652 = vmatpush2.bf16.msra.mxu0 0
        %1653 = vmatprep.mubr.bf16.mxu0 0
        %1654 = vmatmul.mubr.bf16.gmra.mxu0 %v1616
        %v1655 = vpop.f32.mrf.mxu0
        %v1656 = vadd.f32 0.0, %v1655
        %v1657 = vpop.f32.mrf.mxu0
        %v1658 = vpop.f32.mrf.mxu0
        %v1659 = vpop.f32.mrf.mxu0
        %1660 = vdwg.mxu0
        %v1662 = vsel %vm1333, %v1427, 0
        %v1665 = vsel %vm1433, %v961, 0
        %1667 = vmatprep.subr.bf16.mxu0 0
        %1668 = vmatpush1.bf16.msra.mxu0 0
        %1669 = vmatprep.subr.bf16.mxu0 0
        %1670 = vmatpush1.bf16.msra.mxu0 0
        %1671 = vmatprep.subr.bf16.mxu0 0
        %1672 = vmatpush1.bf16.msra.mxu0 0
        %1673 = vmatprep.subr.bf16.mxu0 0
        %1674 = vmatpush1.bf16.msra.mxu0 0
        %1675 = vmatprep.subr.bf16.mxu0 0
        %1676 = vmatpush1.bf16.msra.mxu0 0
        %1677 = vmatprep.subr.bf16.mxu0 0
        %1678 = vmatpush1.bf16.msra.mxu0 0
        %1679 = vmatprep.subr.bf16.mxu0 0
        %1680 = vmatpush1.bf16.msra.mxu0 0
        %1681 = vmatprep.subr.bf16.mxu0 0
        %1682 = vmatpush1.bf16.msra.mxu0 %v1665
        %1683 = vmatprep.subr.bf16.mxu0 0
        %1684 = vmatpush2.bf16.msra.mxu0 0
        %1685 = vmatprep.subr.bf16.mxu0 0
        %1686 = vmatpush2.bf16.msra.mxu0 0
        %1687 = vmatprep.subr.bf16.mxu0 0
        %1688 = vmatpush2.bf16.msra.mxu0 0
        %1689 = vmatprep.subr.bf16.mxu0 0
        %1690 = vmatpush2.bf16.msra.mxu0 0
        %1691 = vmatprep.subr.bf16.mxu0 0
        %1692 = vmatpush2.bf16.msra.mxu0 0
        %1693 = vmatprep.subr.bf16.mxu0 0
        %1694 = vmatpush2.bf16.msra.mxu0 0
        %1695 = vmatprep.subr.bf16.mxu0 0
        %1696 = vmatpush2.bf16.msra.mxu0 0
        %1697 = vmatprep.subr.bf16.mxu0 0
        %1698 = vmatpush2.bf16.msra.mxu0 0
        %1699 = vmatprep.mubr.bf16.mxu0 0
        %1700 = vmatmul.mubr.bf16.gmra.mxu0 %v1662
        %v1701 = vpop.f32.mrf.mxu0
        %v1702 = vadd.f32 0.0, %v1701
        %v1703 = vpop.f32.mrf.mxu0
        %v1704 = vpop.f32.mrf.mxu0
        %v1705 = vpop.f32.mrf.mxu0
        %1706 = vdwg.mxu0
        %v1708 = vsel %vm1333, %v1428, 0
        %v1711 = vsel %vm1433, %v962, 0
        %1713 = vmatprep.subr.bf16.mxu0 0
        %1714 = vmatpush1.bf16.msra.mxu0 0
        %1715 = vmatprep.subr.bf16.mxu0 0
        %1716 = vmatpush1.bf16.msra.mxu0 0
        %1717 = vmatprep.subr.bf16.mxu0 0
        %1718 = vmatpush1.bf16.msra.mxu0 0
        %1719 = vmatprep.subr.bf16.mxu0 0
        %1720 = vmatpush1.bf16.msra.mxu0 0
        %1721 = vmatprep.subr.bf16.mxu0 0
        %1722 = vmatpush1.bf16.msra.mxu0 0
        %1723 = vmatprep.subr.bf16.mxu0 0
        %1724 = vmatpush1.bf16.msra.mxu0 0
        %1725 = vmatprep.subr.bf16.mxu0 0
        %1726 = vmatpush1.bf16.msra.mxu0 0
        %1727 = vmatprep.subr.bf16.mxu0 0
        %1728 = vmatpush1.bf16.msra.mxu0 %v1711
        %1729 = vmatprep.subr.bf16.mxu0 0
        %1730 = vmatpush2.bf16.msra.mxu0 0
        %1731 = vmatprep.subr.bf16.mxu0 0
        %1732 = vmatpush2.bf16.msra.mxu0 0
        %1733 = vmatprep.subr.bf16.mxu0 0
        %1734 = vmatpush2.bf16.msra.mxu0 0
        %1735 = vmatprep.subr.bf16.mxu0 0
        %1736 = vmatpush2.bf16.msra.mxu0 0
        %1737 = vmatprep.subr.bf16.mxu0 0
        %1738 = vmatpush2.bf16.msra.mxu0 0
        %1739 = vmatprep.subr.bf16.mxu0 0
        %1740 = vmatpush2.bf16.msra.mxu0 0
        %1741 = vmatprep.subr.bf16.mxu0 0
        %1742 = vmatpush2.bf16.msra.mxu0 0
        %1743 = vmatprep.subr.bf16.mxu0 0
        %1744 = vmatpush2.bf16.msra.mxu0 0
        %1745 = vmatprep.mubr.bf16.mxu0 0
        %1746 = vmatmul.mubr.bf16.gmra.mxu0 %v1708
        %v1747 = vpop.f32.mrf.mxu0
        %v1748 = vadd.f32 0.0, %v1747
        %v1749 = vpop.f32.mrf.mxu0
        %v1750 = vpop.f32.mrf.mxu0
        %v1751 = vpop.f32.mrf.mxu0
        %1752 = vdwg.mxu0
        %v1754 = vsel %vm1333, %v1429, 0
        %v1757 = vsel %vm1433, %v963, 0
        %1759 = vmatprep.subr.bf16.mxu0 0
        %1760 = vmatpush1.bf16.msra.mxu0 0
        %1761 = vmatprep.subr.bf16.mxu0 0
        %1762 = vmatpush1.bf16.msra.mxu0 0
        %1763 = vmatprep.subr.bf16.mxu0 0
        %1764 = vmatpush1.bf16.msra.mxu0 0
        %1765 = vmatprep.subr.bf16.mxu0 0
        %1766 = vmatpush1.bf16.msra.mxu0 0
        %1767 = vmatprep.subr.bf16.mxu0 0
        %1768 = vmatpush1.bf16.msra.mxu0 0
        %1769 = vmatprep.subr.bf16.mxu0 0
        %1770 = vmatpush1.bf16.msra.mxu0 0
        %1771 = vmatprep.subr.bf16.mxu0 0
        %1772 = vmatpush1.bf16.msra.mxu0 0
        %1773 = vmatprep.subr.bf16.mxu0 0
        %1774 = vmatpush1.bf16.msra.mxu0 %v1757
        %1775 = vmatprep.subr.bf16.mxu0 0
        %1776 = vmatpush2.bf16.msra.mxu0 0
        %1777 = vmatprep.subr.bf16.mxu0 0
        %1778 = vmatpush2.bf16.msra.mxu0 0
        %1779 = vmatprep.subr.bf16.mxu0 0
        %1780 = vmatpush2.bf16.msra.mxu0 0
        %1781 = vmatprep.subr.bf16.mxu0 0
        %1782 = vmatpush2.bf16.msra.mxu0 0
        %1783 = vmatprep.subr.bf16.mxu0 0
        %1784 = vmatpush2.bf16.msra.mxu0 0
        %1785 = vmatprep.subr.bf16.mxu0 0
        %1786 = vmatpush2.bf16.msra.mxu0 0
        %1787 = vmatprep.subr.bf16.mxu0 0
        %1788 = vmatpush2.bf16.msra.mxu0 0
        %1789 = vmatprep.subr.bf16.mxu0 0
        %1790 = vmatpush2.bf16.msra.mxu0 0
        %1791 = vmatprep.mubr.bf16.mxu0 0
        %1792 = vmatmul.mubr.bf16.gmra.mxu0 %v1754
        %v1793 = vpop.f32.mrf.mxu0
        %v1794 = vadd.f32 0.0, %v1793
        %v1795 = vpop.f32.mrf.mxu0
        %v1796 = vpop.f32.mrf.mxu0
        %v1797 = vpop.f32.mrf.mxu0
        %1798 = vdwg.mxu0
        %v1799 = vld [vmem:[%s5] sm:$0xff]
        %v1800 = vld [vmem:[%s5 + $0x8] sm:$0xff]
        %v1801 = vld [vmem:[%s5 + $0x10] sm:$0xff]
        %v1802 = vld [vmem:[%s5 + $0x18] sm:$0xff]
        %v1803 = vld [vmem:[%s5 + $0x20] sm:$0xff]
        %v1804 = vld [vmem:[%s5 + $0x28] sm:$0xff]
        %v1805 = vld [vmem:[%s5 + $0x30] sm:$0xff]
        %v1806 = vld [vmem:[%s5 + $0x38] sm:$0xff]
        %v1807 = vld [vmem:[%s5 + $0x40] sm:$0xff]
        %v1808 = vld [vmem:[%s5 + $0x48] sm:$0xff]
        %v1809 = vld [vmem:[%s5 + $0x50] sm:$0xff]
        %v1810 = vld [vmem:[%s5 + $0x58] sm:$0xff]
        %v1811 = vld [vmem:[%s5 + $0x60] sm:$0xff]
        %v1812 = vld [vmem:[%s5 + $0x68] sm:$0xff]
        %v1813 = vld [vmem:[%s5 + $0x70] sm:$0xff]
        %v1814 = vld [vmem:[%s5 + $0x78] sm:$0xff]
        %v1815 = vld [vmem:[%s5 + $0x80] sm:$0xff]
        %v1816 = vld [vmem:[%s5 + $0x88] sm:$0xff]
        %v1817 = vld [vmem:[%s5 + $0x90] sm:$0xff]
        %v1818 = vld [vmem:[%s5 + $0x98] sm:$0xff]
        %v1819 = vld [vmem:[%s5 + $0xa0] sm:$0xff]
        %v1820 = vld [vmem:[%s5 + $0xa8] sm:$0xff]
        %v1821 = vld [vmem:[%s5 + $0xb0] sm:$0xff]
        %v1822 = vld [vmem:[%s5 + $0xb8] sm:$0xff]
        %v1823 = vld [vmem:[%s5 + $0xc0] sm:$0xff]
        %v1824 = vld [vmem:[%s5 + $0xc8] sm:$0xff]
        %v1825 = vld [vmem:[%s5 + $0xd0] sm:$0xff]
        %v1826 = vld [vmem:[%s5 + $0xd8] sm:$0xff]
        %v1827 = vld [vmem:[%s5 + $0xe0] sm:$0xff]
        %v1828 = vld [vmem:[%s5 + $0xe8] sm:$0xff]
        %v1829 = vld [vmem:[%s5 + $0xf0] sm:$0xff]
        %v1830 = vld [vmem:[%s5 + $0xf8] sm:$0xff]
        %v1831 = vld [vmem:[%s5 + $0x100] sm:$0xff]
        %v1832 = vld [vmem:[%s5 + $0x108] sm:$0xff]
        %v1833 = vld [vmem:[%s5 + $0x110] sm:$0xff]
        %v1834 = vld [vmem:[%s5 + $0x118] sm:$0xff]
        %v1835 = vld [vmem:[%s5 + $0x120] sm:$0xff]
        %v1836 = vld [vmem:[%s5 + $0x128] sm:$0xff]
        %v1837 = vld [vmem:[%s5 + $0x130] sm:$0xff]
        %v1838 = vld [vmem:[%s5 + $0x138] sm:$0xff]
        %v1839 = vld [vmem:[%s5 + $0x140] sm:$0xff]
        %v1840 = vld [vmem:[%s5 + $0x148] sm:$0xff]
        %v1841 = vld [vmem:[%s5 + $0x150] sm:$0xff]
        %v1842 = vld [vmem:[%s5 + $0x158] sm:$0xff]
        %v1843 = vld [vmem:[%s5 + $0x160] sm:$0xff]
        %v1844 = vld [vmem:[%s5 + $0x168] sm:$0xff]
        %v1845 = vld [vmem:[%s5 + $0x170] sm:$0xff]
        %v1846 = vld [vmem:[%s5 + $0x178] sm:$0xff]
        %v1847 = vld [vmem:[%s5 + $0x180] sm:$0xff]
        %v1848 = vld [vmem:[%s5 + $0x188] sm:$0xff]
        %v1849 = vld [vmem:[%s5 + $0x190] sm:$0xff]
        %v1850 = vld [vmem:[%s5 + $0x198] sm:$0xff]
        %v1851 = vld [vmem:[%s5 + $0x1a0] sm:$0xff]
        %v1852 = vld [vmem:[%s5 + $0x1a8] sm:$0xff]
        %v1853 = vld [vmem:[%s5 + $0x1b0] sm:$0xff]
        %v1854 = vld [vmem:[%s5 + $0x1b8] sm:$0xff]
        %v1855 = vld [vmem:[%s5 + $0x1c0] sm:$0xff]
        %v1856 = vld [vmem:[%s5 + $0x1c8] sm:$0xff]
        %v1857 = vld [vmem:[%s5 + $0x1d0] sm:$0xff]
        %v1858 = vld [vmem:[%s5 + $0x1d8] sm:$0xff]
        %v1859 = vld [vmem:[%s5 + $0x1e0] sm:$0xff]
        %v1860 = vld [vmem:[%s5 + $0x1e8] sm:$0xff]
        %v1861 = vld [vmem:[%s5 + $0x1f0] sm:$0xff]
        %v1862 = vld [vmem:[%s5 + $0x1f8] sm:$0xff]
        %v1864 = vsel %vm964, %v1472, 0
        %1866 = vmatprep.subr.mxu0 0.0
        %1867 = vmatpush1.msra.mxu0 0.0
        %1868 = vmatprep.subr.mxu0 0.0
        %1869 = vmatpush1.msra.mxu0 0.0
        %1870 = vmatprep.subr.mxu0 0.0
        %1871 = vmatpush1.msra.mxu0 0.0
        %1872 = vmatprep.subr.mxu0 0.0
        %1873 = vmatpush1.msra.mxu0 0.0
        %1874 = vmatprep.subr.mxu0 0.0
        %1875 = vmatpush1.msra.mxu0 0.0
        %1876 = vmatprep.subr.mxu0 0.0
        %1877 = vmatpush1.msra.mxu0 0.0
        %1878 = vmatprep.subr.mxu0 0.0
        %1879 = vmatpush1.msra.mxu0 0.0
        %1880 = vmatprep.subr.mxu0 0.0
        %1881 = vmatpush1.msra.mxu0 0.0
        %1882 = vmatprep.subr.mxu0 0.0
        %1883 = vmatpush1.msra.mxu0 %v1806
        %1884 = vmatprep.subr.mxu0 0.0
        %1885 = vmatpush1.msra.mxu0 %v1805
        %1886 = vmatprep.subr.mxu0 0.0
        %1887 = vmatpush1.msra.mxu0 %v1804
        %1888 = vmatprep.subr.mxu0 0.0
        %1889 = vmatpush1.msra.mxu0 %v1803
        %1890 = vmatprep.subr.mxu0 0.0
        %1891 = vmatpush1.msra.mxu0 %v1802
        %1892 = vmatprep.subr.mxu0 0.0
        %1893 = vmatpush1.msra.mxu0 %v1801
        %1894 = vmatprep.subr.mxu0 0.0
        %1895 = vmatpush1.msra.mxu0 %v1800
        %1896 = vmatprep.subr.mxu0 0.0
        %1897 = vmatpush1.msra.mxu0 %v1799
        %1898 = vmatprep.subr.mxu0 0.0
        %1899 = vmatpush2.msra.mxu0 0.0
        %1900 = vmatprep.subr.mxu0 0.0
        %1901 = vmatpush2.msra.mxu0 0.0
        %1902 = vmatprep.subr.mxu0 0.0
        %1903 = vmatpush2.msra.mxu0 0.0
        %1904 = vmatprep.subr.mxu0 0.0
        %1905 = vmatpush2.msra.mxu0 0.0
        %1906 = vmatprep.subr.mxu0 0.0
        %1907 = vmatpush2.msra.mxu0 0.0
        %1908 = vmatprep.subr.mxu0 0.0
        %1909 = vmatpush2.msra.mxu0 0.0
        %1910 = vmatprep.subr.mxu0 0.0
        %1911 = vmatpush2.msra.mxu0 0.0
        %1912 = vmatprep.subr.mxu0 0.0
        %1913 = vmatpush2.msra.mxu0 0.0
        %1914 = vmatprep.subr.mxu0 0.0
        %1915 = vmatpush2.msra.mxu0 0.0
        %1916 = vmatprep.subr.mxu0 0.0
        %1917 = vmatpush2.msra.mxu0 0.0
        %1918 = vmatprep.subr.mxu0 0.0
        %1919 = vmatpush2.msra.mxu0 0.0
        %1920 = vmatprep.subr.mxu0 0.0
        %1921 = vmatpush2.msra.mxu0 0.0
        %1922 = vmatprep.subr.mxu0 0.0
        %1923 = vmatpush2.msra.mxu0 0.0
        %1924 = vmatprep.subr.mxu0 0.0
        %1925 = vmatpush2.msra.mxu0 0.0
        %1926 = vmatprep.subr.mxu0 0.0
        %1927 = vmatpush2.msra.mxu0 0.0
        %1928 = vmatprep.subr.mxu0 0.0
        %1929 = vmatpush2.msra.mxu0 0.0
        %1930 = vmatprep.mubr.f32.mxu0 0.0
        %1931 = vmatmul.mubr.f32.gmra.mxu0 %v1864
        %v1932 = vpop.f32.mrf.mxu0
        %v1933 = vadd.f32 0.0, %v1932
        %v1934 = vpop.f32.mrf.mxu0
        %1935 = vdwg.mxu0
        %v1937 = vsel %vm964, %v1518, 0
        %1939 = vmatprep.subr.mxu0 0.0
        %1940 = vmatpush1.msra.mxu0 0.0
        %1941 = vmatprep.subr.mxu0 0.0
        %1942 = vmatpush1.msra.mxu0 0.0
        %1943 = vmatprep.subr.mxu0 0.0
        %1944 = vmatpush1.msra.mxu0 0.0
        %1945 = vmatprep.subr.mxu0 0.0
        %1946 = vmatpush1.msra.mxu0 0.0
        %1947 = vmatprep.subr.mxu0 0.0
        %1948 = vmatpush1.msra.mxu0 0.0
        %1949 = vmatprep.subr.mxu0 0.0
        %1950 = vmatpush1.msra.mxu0 0.0
        %1951 = vmatprep.subr.mxu0 0.0
        %1952 = vmatpush1.msra.mxu0 0.0
        %1953 = vmatprep.subr.mxu0 0.0
        %1954 = vmatpush1.msra.mxu0 0.0
        %1955 = vmatprep.subr.mxu0 0.0
        %1956 = vmatpush1.msra.mxu0 %v1814
        %1957 = vmatprep.subr.mxu0 0.0
        %1958 = vmatpush1.msra.mxu0 %v1813
        %1959 = vmatprep.subr.mxu0 0.0
        %1960 = vmatpush1.msra.mxu0 %v1812
        %1961 = vmatprep.subr.mxu0 0.0
        %1962 = vmatpush1.msra.mxu0 %v1811
        %1963 = vmatprep.subr.mxu0 0.0
        %1964 = vmatpush1.msra.mxu0 %v1810
        %1965 = vmatprep.subr.mxu0 0.0
        %1966 = vmatpush1.msra.mxu0 %v1809
        %1967 = vmatprep.subr.mxu0 0.0
        %1968 = vmatpush1.msra.mxu0 %v1808
        %1969 = vmatprep.subr.mxu0 0.0
        %1970 = vmatpush1.msra.mxu0 %v1807
        %1971 = vmatprep.subr.mxu0 0.0
        %1972 = vmatpush2.msra.mxu0 0.0
        %1973 = vmatprep.subr.mxu0 0.0
        %1974 = vmatpush2.msra.mxu0 0.0
        %1975 = vmatprep.subr.mxu0 0.0
        %1976 = vmatpush2.msra.mxu0 0.0
        %1977 = vmatprep.subr.mxu0 0.0
        %1978 = vmatpush2.msra.mxu0 0.0
        %1979 = vmatprep.subr.mxu0 0.0
        %1980 = vmatpush2.msra.mxu0 0.0
        %1981 = vmatprep.subr.mxu0 0.0
        %1982 = vmatpush2.msra.mxu0 0.0
        %1983 = vmatprep.subr.mxu0 0.0
        %1984 = vmatpush2.msra.mxu0 0.0
        %1985 = vmatprep.subr.mxu0 0.0
        %1986 = vmatpush2.msra.mxu0 0.0
        %1987 = vmatprep.subr.mxu0 0.0
        %1988 = vmatpush2.msra.mxu0 0.0
        %1989 = vmatprep.subr.mxu0 0.0
        %1990 = vmatpush2.msra.mxu0 0.0
        %1991 = vmatprep.subr.mxu0 0.0
        %1992 = vmatpush2.msra.mxu0 0.0
        %1993 = vmatprep.subr.mxu0 0.0
        %1994 = vmatpush2.msra.mxu0 0.0
        %1995 = vmatprep.subr.mxu0 0.0
        %1996 = vmatpush2.msra.mxu0 0.0
        %1997 = vmatprep.subr.mxu0 0.0
        %1998 = vmatpush2.msra.mxu0 0.0
        %1999 = vmatprep.subr.mxu0 0.0
        %2000 = vmatpush2.msra.mxu0 0.0
        %2001 = vmatprep.subr.mxu0 0.0
        %2002 = vmatpush2.msra.mxu0 0.0
        %2003 = vmatprep.mubr.f32.mxu0 0.0
        %2004 = vmatmul.mubr.f32.gmra.mxu0 %v1937
        %v2005 = vpop.f32.mrf.mxu0
        %v2006 = vadd.f32 0.0, %v2005
        %v2007 = vpop.f32.mrf.mxu0
        %2008 = vdwg.mxu0
        %v2010 = vsel %vm964, %v1564, 0
        %2012 = vmatprep.subr.mxu0 0.0
        %2013 = vmatpush1.msra.mxu0 0.0
        %2014 = vmatprep.subr.mxu0 0.0
        %2015 = vmatpush1.msra.mxu0 0.0
        %2016 = vmatprep.subr.mxu0 0.0
        %2017 = vmatpush1.msra.mxu0 0.0
        %2018 = vmatprep.subr.mxu0 0.0
        %2019 = vmatpush1.msra.mxu0 0.0
        %2020 = vmatprep.subr.mxu0 0.0
        %2021 = vmatpush1.msra.mxu0 0.0
        %2022 = vmatprep.subr.mxu0 0.0
        %2023 = vmatpush1.msra.mxu0 0.0
        %2024 = vmatprep.subr.mxu0 0.0
        %2025 = vmatpush1.msra.mxu0 0.0
        %2026 = vmatprep.subr.mxu0 0.0
        %2027 = vmatpush1.msra.mxu0 0.0
        %2028 = vmatprep.subr.mxu0 0.0
        %2029 = vmatpush1.msra.mxu0 %v1822
        %2030 = vmatprep.subr.mxu0 0.0
        %2031 = vmatpush1.msra.mxu0 %v1821
        %2032 = vmatprep.subr.mxu0 0.0
        %2033 = vmatpush1.msra.mxu0 %v1820
        %2034 = vmatprep.subr.mxu0 0.0
        %2035 = vmatpush1.msra.mxu0 %v1819
        %2036 = vmatprep.subr.mxu0 0.0
        %2037 = vmatpush1.msra.mxu0 %v1818
        %2038 = vmatprep.subr.mxu0 0.0
        %2039 = vmatpush1.msra.mxu0 %v1817
        %2040 = vmatprep.subr.mxu0 0.0
        %2041 = vmatpush1.msra.mxu0 %v1816
        %2042 = vmatprep.subr.mxu0 0.0
        %2043 = vmatpush1.msra.mxu0 %v1815
        %2044 = vmatprep.subr.mxu0 0.0
        %2045 = vmatpush2.msra.mxu0 0.0
        %2046 = vmatprep.subr.mxu0 0.0
        %2047 = vmatpush2.msra.mxu0 0.0
        %2048 = vmatprep.subr.mxu0 0.0
        %2049 = vmatpush2.msra.mxu0 0.0
        %2050 = vmatprep.subr.mxu0 0.0
        %2051 = vmatpush2.msra.mxu0 0.0
        %2052 = vmatprep.subr.mxu0 0.0
        %2053 = vmatpush2.msra.mxu0 0.0
        %2054 = vmatprep.subr.mxu0 0.0
        %2055 = vmatpush2.msra.mxu0 0.0
        %2056 = vmatprep.subr.mxu0 0.0
        %2057 = vmatpush2.msra.mxu0 0.0
        %2058 = vmatprep.subr.mxu0 0.0
        %2059 = vmatpush2.msra.mxu0 0.0
        %2060 = vmatprep.subr.mxu0 0.0
        %2061 = vmatpush2.msra.mxu0 0.0
        %2062 = vmatprep.subr.mxu0 0.0
        %2063 = vmatpush2.msra.mxu0 0.0
        %2064 = vmatprep.subr.mxu0 0.0
        %2065 = vmatpush2.msra.mxu0 0.0
        %2066 = vmatprep.subr.mxu0 0.0
        %2067 = vmatpush2.msra.mxu0 0.0
        %2068 = vmatprep.subr.mxu0 0.0
        %2069 = vmatpush2.msra.mxu0 0.0
        %2070 = vmatprep.subr.mxu0 0.0
        %2071 = vmatpush2.msra.mxu0 0.0
        %2072 = vmatprep.subr.mxu0 0.0
        %2073 = vmatpush2.msra.mxu0 0.0
        %2074 = vmatprep.subr.mxu0 0.0
        %2075 = vmatpush2.msra.mxu0 0.0
        %2076 = vmatprep.mubr.f32.mxu0 0.0
        %2077 = vmatmul.mubr.f32.gmra.mxu0 %v2010
        %v2078 = vpop.f32.mrf.mxu0
        %v2079 = vadd.f32 0.0, %v2078
        %v2080 = vpop.f32.mrf.mxu0
        %2081 = vdwg.mxu0
        %v2083 = vsel %vm964, %v1610, 0
        %2085 = vmatprep.subr.mxu0 0.0
        %2086 = vmatpush1.msra.mxu0 0.0
        %2087 = vmatprep.subr.mxu0 0.0
        %2088 = vmatpush1.msra.mxu0 0.0
        %2089 = vmatprep.subr.mxu0 0.0
        %2090 = vmatpush1.msra.mxu0 0.0
        %2091 = vmatprep.subr.mxu0 0.0
        %2092 = vmatpush1.msra.mxu0 0.0
        %2093 = vmatprep.subr.mxu0 0.0
        %2094 = vmatpush1.msra.mxu0 0.0
        %2095 = vmatprep.subr.mxu0 0.0
        %2096 = vmatpush1.msra.mxu0 0.0
        %2097 = vmatprep.subr.mxu0 0.0
        %2098 = vmatpush1.msra.mxu0 0.0
        %2099 = vmatprep.subr.mxu0 0.0
        %2100 = vmatpush1.msra.mxu0 0.0
        %2101 = vmatprep.subr.mxu0 0.0
        %2102 = vmatpush1.msra.mxu0 %v1830
        %2103 = vmatprep.subr.mxu0 0.0
        %2104 = vmatpush1.msra.mxu0 %v1829
        %2105 = vmatprep.subr.mxu0 0.0
        %2106 = vmatpush1.msra.mxu0 %v1828
        %2107 = vmatprep.subr.mxu0 0.0
        %2108 = vmatpush1.msra.mxu0 %v1827
        %2109 = vmatprep.subr.mxu0 0.0
        %2110 = vmatpush1.msra.mxu0 %v1826
        %2111 = vmatprep.subr.mxu0 0.0
        %2112 = vmatpush1.msra.mxu0 %v1825
        %2113 = vmatprep.subr.mxu0 0.0
        %2114 = vmatpush1.msra.mxu0 %v1824
        %2115 = vmatprep.subr.mxu0 0.0
        %2116 = vmatpush1.msra.mxu0 %v1823
        %2117 = vmatprep.subr.mxu0 0.0
        %2118 = vmatpush2.msra.mxu0 0.0
        %2119 = vmatprep.subr.mxu0 0.0
        %2120 = vmatpush2.msra.mxu0 0.0
        %2121 = vmatprep.subr.mxu0 0.0
        %2122 = vmatpush2.msra.mxu0 0.0
        %2123 = vmatprep.subr.mxu0 0.0
        %2124 = vmatpush2.msra.mxu0 0.0
        %2125 = vmatprep.subr.mxu0 0.0
        %2126 = vmatpush2.msra.mxu0 0.0
        %2127 = vmatprep.subr.mxu0 0.0
        %2128 = vmatpush2.msra.mxu0 0.0
        %2129 = vmatprep.subr.mxu0 0.0
        %2130 = vmatpush2.msra.mxu0 0.0
        %2131 = vmatprep.subr.mxu0 0.0
        %2132 = vmatpush2.msra.mxu0 0.0
        %2133 = vmatprep.subr.mxu0 0.0
        %2134 = vmatpush2.msra.mxu0 0.0
        %2135 = vmatprep.subr.mxu0 0.0
        %2136 = vmatpush2.msra.mxu0 0.0
        %2137 = vmatprep.subr.mxu0 0.0
        %2138 = vmatpush2.msra.mxu0 0.0
        %2139 = vmatprep.subr.mxu0 0.0
        %2140 = vmatpush2.msra.mxu0 0.0
        %2141 = vmatprep.subr.mxu0 0.0
        %2142 = vmatpush2.msra.mxu0 0.0
        %2143 = vmatprep.subr.mxu0 0.0
        %2144 = vmatpush2.msra.mxu0 0.0
        %2145 = vmatprep.subr.mxu0 0.0
        %2146 = vmatpush2.msra.mxu0 0.0
        %2147 = vmatprep.subr.mxu0 0.0
        %2148 = vmatpush2.msra.mxu0 0.0
        %2149 = vmatprep.mubr.f32.mxu0 0.0
        %2150 = vmatmul.mubr.f32.gmra.mxu0 %v2083
        %v2151 = vpop.f32.mrf.mxu0
        %v2152 = vadd.f32 0.0, %v2151
        %v2153 = vpop.f32.mrf.mxu0
        %2154 = vdwg.mxu0
        %v2156 = vsel %vm964, %v1656, 0
        %2158 = vmatprep.subr.mxu0 0.0
        %2159 = vmatpush1.msra.mxu0 0.0
        %2160 = vmatprep.subr.mxu0 0.0
        %2161 = vmatpush1.msra.mxu0 0.0
        %2162 = vmatprep.subr.mxu0 0.0
        %2163 = vmatpush1.msra.mxu0 0.0
        %2164 = vmatprep.subr.mxu0 0.0
        %2165 = vmatpush1.msra.mxu0 0.0
        %2166 = vmatprep.subr.mxu0 0.0
        %2167 = vmatpush1.msra.mxu0 0.0
        %2168 = vmatprep.subr.mxu0 0.0
        %2169 = vmatpush1.msra.mxu0 0.0
        %2170 = vmatprep.subr.mxu0 0.0
        %2171 = vmatpush1.msra.mxu0 0.0
        %2172 = vmatprep.subr.mxu0 0.0
        %2173 = vmatpush1.msra.mxu0 0.0
        %2174 = vmatprep.subr.mxu0 0.0
        %2175 = vmatpush1.msra.mxu0 %v1838
        %2176 = vmatprep.subr.mxu0 0.0
        %2177 = vmatpush1.msra.mxu0 %v1837
        %2178 = vmatprep.subr.mxu0 0.0
        %2179 = vmatpush1.msra.mxu0 %v1836
        %2180 = vmatprep.subr.mxu0 0.0
        %2181 = vmatpush1.msra.mxu0 %v1835
        %2182 = vmatprep.subr.mxu0 0.0
        %2183 = vmatpush1.msra.mxu0 %v1834
        %2184 = vmatprep.subr.mxu0 0.0
        %2185 = vmatpush1.msra.mxu0 %v1833
        %2186 = vmatprep.subr.mxu0 0.0
        %2187 = vmatpush1.msra.mxu0 %v1832
        %2188 = vmatprep.subr.mxu0 0.0
        %2189 = vmatpush1.msra.mxu0 %v1831
        %2190 = vmatprep.subr.mxu0 0.0
        %2191 = vmatpush2.msra.mxu0 0.0
        %2192 = vmatprep.subr.mxu0 0.0
        %2193 = vmatpush2.msra.mxu0 0.0
        %2194 = vmatprep.subr.mxu0 0.0
        %2195 = vmatpush2.msra.mxu0 0.0
        %2196 = vmatprep.subr.mxu0 0.0
        %2197 = vmatpush2.msra.mxu0 0.0
        %2198 = vmatprep.subr.mxu0 0.0
        %2199 = vmatpush2.msra.mxu0 0.0
        %2200 = vmatprep.subr.mxu0 0.0
        %2201 = vmatpush2.msra.mxu0 0.0
        %2202 = vmatprep.subr.mxu0 0.0
        %2203 = vmatpush2.msra.mxu0 0.0
        %2204 = vmatprep.subr.mxu0 0.0
        %2205 = vmatpush2.msra.mxu0 0.0
        %2206 = vmatprep.subr.mxu0 0.0
        %2207 = vmatpush2.msra.mxu0 0.0
        %2208 = vmatprep.subr.mxu0 0.0
        %2209 = vmatpush2.msra.mxu0 0.0
        %2210 = vmatprep.subr.mxu0 0.0
        %2211 = vmatpush2.msra.mxu0 0.0
        %2212 = vmatprep.subr.mxu0 0.0
        %2213 = vmatpush2.msra.mxu0 0.0
        %2214 = vmatprep.subr.mxu0 0.0
        %2215 = vmatpush2.msra.mxu0 0.0
        %2216 = vmatprep.subr.mxu0 0.0
        %2217 = vmatpush2.msra.mxu0 0.0
        %2218 = vmatprep.subr.mxu0 0.0
        %2219 = vmatpush2.msra.mxu0 0.0
        %2220 = vmatprep.subr.mxu0 0.0
        %2221 = vmatpush2.msra.mxu0 0.0
        %2222 = vmatprep.mubr.f32.mxu0 0.0
        %2223 = vmatmul.mubr.f32.gmra.mxu0 %v2156
        %v2224 = vpop.f32.mrf.mxu0
        %v2225 = vadd.f32 0.0, %v2224
        %v2226 = vpop.f32.mrf.mxu0
        %2227 = vdwg.mxu0
        %v2229 = vsel %vm964, %v1702, 0
        %2231 = vmatprep.subr.mxu0 0.0
        %2232 = vmatpush1.msra.mxu0 0.0
        %2233 = vmatprep.subr.mxu0 0.0
        %2234 = vmatpush1.msra.mxu0 0.0
        %2235 = vmatprep.subr.mxu0 0.0
        %2236 = vmatpush1.msra.mxu0 0.0
        %2237 = vmatprep.subr.mxu0 0.0
        %2238 = vmatpush1.msra.mxu0 0.0
        %2239 = vmatprep.subr.mxu0 0.0
        %2240 = vmatpush1.msra.mxu0 0.0
        %2241 = vmatprep.subr.mxu0 0.0
        %2242 = vmatpush1.msra.mxu0 0.0
        %2243 = vmatprep.subr.mxu0 0.0
        %2244 = vmatpush1.msra.mxu0 0.0
        %2245 = vmatprep.subr.mxu0 0.0
        %2246 = vmatpush1.msra.mxu0 0.0
        %2247 = vmatprep.subr.mxu0 0.0
        %2248 = vmatpush1.msra.mxu0 %v1846
        %2249 = vmatprep.subr.mxu0 0.0
        %2250 = vmatpush1.msra.mxu0 %v1845
        %2251 = vmatprep.subr.mxu0 0.0
        %2252 = vmatpush1.msra.mxu0 %v1844
        %2253 = vmatprep.subr.mxu0 0.0
        %2254 = vmatpush1.msra.mxu0 %v1843
        %2255 = vmatprep.subr.mxu0 0.0
        %2256 = vmatpush1.msra.mxu0 %v1842
        %2257 = vmatprep.subr.mxu0 0.0
        %2258 = vmatpush1.msra.mxu0 %v1841
        %2259 = vmatprep.subr.mxu0 0.0
        %2260 = vmatpush1.msra.mxu0 %v1840
        %2261 = vmatprep.subr.mxu0 0.0
        %2262 = vmatpush1.msra.mxu0 %v1839
        %2263 = vmatprep.subr.mxu0 0.0
        %2264 = vmatpush2.msra.mxu0 0.0
        %2265 = vmatprep.subr.mxu0 0.0
        %2266 = vmatpush2.msra.mxu0 0.0
        %2267 = vmatprep.subr.mxu0 0.0
        %2268 = vmatpush2.msra.mxu0 0.0
        %2269 = vmatprep.subr.mxu0 0.0
        %2270 = vmatpush2.msra.mxu0 0.0
        %2271 = vmatprep.subr.mxu0 0.0
        %2272 = vmatpush2.msra.mxu0 0.0
        %2273 = vmatprep.subr.mxu0 0.0
        %2274 = vmatpush2.msra.mxu0 0.0
        %2275 = vmatprep.subr.mxu0 0.0
        %2276 = vmatpush2.msra.mxu0 0.0
        %2277 = vmatprep.subr.mxu0 0.0
        %2278 = vmatpush2.msra.mxu0 0.0
        %2279 = vmatprep.subr.mxu0 0.0
        %2280 = vmatpush2.msra.mxu0 0.0
        %2281 = vmatprep.subr.mxu0 0.0
        %2282 = vmatpush2.msra.mxu0 0.0
        %2283 = vmatprep.subr.mxu0 0.0
        %2284 = vmatpush2.msra.mxu0 0.0
        %2285 = vmatprep.subr.mxu0 0.0
        %2286 = vmatpush2.msra.mxu0 0.0
        %2287 = vmatprep.subr.mxu0 0.0
        %2288 = vmatpush2.msra.mxu0 0.0
        %2289 = vmatprep.subr.mxu0 0.0
        %2290 = vmatpush2.msra.mxu0 0.0
        %2291 = vmatprep.subr.mxu0 0.0
        %2292 = vmatpush2.msra.mxu0 0.0
        %2293 = vmatprep.subr.mxu0 0.0
        %2294 = vmatpush2.msra.mxu0 0.0
        %2295 = vmatprep.mubr.f32.mxu0 0.0
        %2296 = vmatmul.mubr.f32.gmra.mxu0 %v2229
        %v2297 = vpop.f32.mrf.mxu0
        %v2298 = vadd.f32 0.0, %v2297
        %v2299 = vpop.f32.mrf.mxu0
        %2300 = vdwg.mxu0
        %v2302 = vsel %vm964, %v1748, 0
        %2304 = vmatprep.subr.mxu0 0.0
        %2305 = vmatpush1.msra.mxu0 0.0
        %2306 = vmatprep.subr.mxu0 0.0
        %2307 = vmatpush1.msra.mxu0 0.0
        %2308 = vmatprep.subr.mxu0 0.0
        %2309 = vmatpush1.msra.mxu0 0.0
        %2310 = vmatprep.subr.mxu0 0.0
        %2311 = vmatpush1.msra.mxu0 0.0
        %2312 = vmatprep.subr.mxu0 0.0
        %2313 = vmatpush1.msra.mxu0 0.0
        %2314 = vmatprep.subr.mxu0 0.0
        %2315 = vmatpush1.msra.mxu0 0.0
        %2316 = vmatprep.subr.mxu0 0.0
        %2317 = vmatpush1.msra.mxu0 0.0
        %2318 = vmatprep.subr.mxu0 0.0
        %2319 = vmatpush1.msra.mxu0 0.0
        %2320 = vmatprep.subr.mxu0 0.0
        %2321 = vmatpush1.msra.mxu0 %v1854
        %2322 = vmatprep.subr.mxu0 0.0
        %2323 = vmatpush1.msra.mxu0 %v1853
        %2324 = vmatprep.subr.mxu0 0.0
        %2325 = vmatpush1.msra.mxu0 %v1852
        %2326 = vmatprep.subr.mxu0 0.0
        %2327 = vmatpush1.msra.mxu0 %v1851
        %2328 = vmatprep.subr.mxu0 0.0
        %2329 = vmatpush1.msra.mxu0 %v1850
        %2330 = vmatprep.subr.mxu0 0.0
        %2331 = vmatpush1.msra.mxu0 %v1849
        %2332 = vmatprep.subr.mxu0 0.0
        %2333 = vmatpush1.msra.mxu0 %v1848
        %2334 = vmatprep.subr.mxu0 0.0
        %2335 = vmatpush1.msra.mxu0 %v1847
        %2336 = vmatprep.subr.mxu0 0.0
        %2337 = vmatpush2.msra.mxu0 0.0
        %2338 = vmatprep.subr.mxu0 0.0
        %2339 = vmatpush2.msra.mxu0 0.0
        %2340 = vmatprep.subr.mxu0 0.0
        %2341 = vmatpush2.msra.mxu0 0.0
        %2342 = vmatprep.subr.mxu0 0.0
        %2343 = vmatpush2.msra.mxu0 0.0
        %2344 = vmatprep.subr.mxu0 0.0
        %2345 = vmatpush2.msra.mxu0 0.0
        %2346 = vmatprep.subr.mxu0 0.0
        %2347 = vmatpush2.msra.mxu0 0.0
        %2348 = vmatprep.subr.mxu0 0.0
        %2349 = vmatpush2.msra.mxu0 0.0
        %2350 = vmatprep.subr.mxu0 0.0
        %2351 = vmatpush2.msra.mxu0 0.0
        %2352 = vmatprep.subr.mxu0 0.0
        %2353 = vmatpush2.msra.mxu0 0.0
        %2354 = vmatprep.subr.mxu0 0.0
        %2355 = vmatpush2.msra.mxu0 0.0
        %2356 = vmatprep.subr.mxu0 0.0
        %2357 = vmatpush2.msra.mxu0 0.0
        %2358 = vmatprep.subr.mxu0 0.0
        %2359 = vmatpush2.msra.mxu0 0.0
        %2360 = vmatprep.subr.mxu0 0.0
        %2361 = vmatpush2.msra.mxu0 0.0
        %2362 = vmatprep.subr.mxu0 0.0
        %2363 = vmatpush2.msra.mxu0 0.0
        %2364 = vmatprep.subr.mxu0 0.0
        %2365 = vmatpush2.msra.mxu0 0.0
        %2366 = vmatprep.subr.mxu0 0.0
        %2367 = vmatpush2.msra.mxu0 0.0
        %2368 = vmatprep.mubr.f32.mxu0 0.0
        %2369 = vmatmul.mubr.f32.gmra.mxu0 %v2302
        %v2370 = vpop.f32.mrf.mxu0
        %v2371 = vadd.f32 0.0, %v2370
        %v2372 = vpop.f32.mrf.mxu0
        %2373 = vdwg.mxu0
        %v2375 = vsel %vm964, %v1794, 0
        %2377 = vmatprep.subr.mxu0 0.0
        %2378 = vmatpush1.msra.mxu0 0.0
        %2379 = vmatprep.subr.mxu0 0.0
        %2380 = vmatpush1.msra.mxu0 0.0
        %2381 = vmatprep.subr.mxu0 0.0
        %2382 = vmatpush1.msra.mxu0 0.0
        %2383 = vmatprep.subr.mxu0 0.0
        %2384 = vmatpush1.msra.mxu0 0.0
        %2385 = vmatprep.subr.mxu0 0.0
        %2386 = vmatpush1.msra.mxu0 0.0
        %2387 = vmatprep.subr.mxu0 0.0
        %2388 = vmatpush1.msra.mxu0 0.0
        %2389 = vmatprep.subr.mxu0 0.0
        %2390 = vmatpush1.msra.mxu0 0.0
        %2391 = vmatprep.subr.mxu0 0.0
        %2392 = vmatpush1.msra.mxu0 0.0
        %2393 = vmatprep.subr.mxu0 0.0
        %2394 = vmatpush1.msra.mxu0 %v1862
        %2395 = vmatprep.subr.mxu0 0.0
        %2396 = vmatpush1.msra.mxu0 %v1861
        %2397 = vmatprep.subr.mxu0 0.0
        %2398 = vmatpush1.msra.mxu0 %v1860
        %2399 = vmatprep.subr.mxu0 0.0
        %2400 = vmatpush1.msra.mxu0 %v1859
        %2401 = vmatprep.subr.mxu0 0.0
        %2402 = vmatpush1.msra.mxu0 %v1858
        %2403 = vmatprep.subr.mxu0 0.0
        %2404 = vmatpush1.msra.mxu0 %v1857
        %2405 = vmatprep.subr.mxu0 0.0
        %2406 = vmatpush1.msra.mxu0 %v1856
        %2407 = vmatprep.subr.mxu0 0.0
        %2408 = vmatpush1.msra.mxu0 %v1855
        %2409 = vmatprep.subr.mxu0 0.0
        %2410 = vmatpush2.msra.mxu0 0.0
        %2411 = vmatprep.subr.mxu0 0.0
        %2412 = vmatpush2.msra.mxu0 0.0
        %2413 = vmatprep.subr.mxu0 0.0
        %2414 = vmatpush2.msra.mxu0 0.0
        %2415 = vmatprep.subr.mxu0 0.0
        %2416 = vmatpush2.msra.mxu0 0.0
        %2417 = vmatprep.subr.mxu0 0.0
        %2418 = vmatpush2.msra.mxu0 0.0
        %2419 = vmatprep.subr.mxu0 0.0
        %2420 = vmatpush2.msra.mxu0 0.0
        %2421 = vmatprep.subr.mxu0 0.0
        %2422 = vmatpush2.msra.mxu0 0.0
        %2423 = vmatprep.subr.mxu0 0.0
        %2424 = vmatpush2.msra.mxu0 0.0
        %2425 = vmatprep.subr.mxu0 0.0
        %2426 = vmatpush2.msra.mxu0 0.0
        %2427 = vmatprep.subr.mxu0 0.0
        %2428 = vmatpush2.msra.mxu0 0.0
        %2429 = vmatprep.subr.mxu0 0.0
        %2430 = vmatpush2.msra.mxu0 0.0
        %2431 = vmatprep.subr.mxu0 0.0
        %2432 = vmatpush2.msra.mxu0 0.0
        %2433 = vmatprep.subr.mxu0 0.0
        %2434 = vmatpush2.msra.mxu0 0.0
        %2435 = vmatprep.subr.mxu0 0.0
        %2436 = vmatpush2.msra.mxu0 0.0
        %2437 = vmatprep.subr.mxu0 0.0
        %2438 = vmatpush2.msra.mxu0 0.0
        %2439 = vmatprep.subr.mxu0 0.0
        %2440 = vmatpush2.msra.mxu0 0.0
        %2441 = vmatprep.mubr.f32.mxu0 0.0
        %2442 = vmatmul.mubr.f32.gmra.mxu0 %v2375
        %v2443 = vpop.f32.mrf.mxu0
        %v2444 = vadd.f32 0.0, %v2443
        %v2445 = vpop.f32.mrf.mxu0
        %2446 = vdwg.mxu0
        %v2447 = vsel %vm746, %v1933, 0.0
        %v2448 = vsel %vm746, %v2006, 0.0
        %v2449 = vadd.f32 %v2447, %v2448
        %v2450 = vsel %vm746, %v2079, 0.0
        %v2451 = vadd.f32 %v2449, %v2450
        %v2452 = vsel %vm746, %v2152, 0.0
        %v2453 = vadd.f32 %v2451, %v2452
        %v2454 = vsel %vm746, %v2225, 0.0
        %v2455 = vadd.f32 %v2453, %v2454
        %v2456 = vsel %vm746, %v2298, 0.0
        %v2457 = vadd.f32 %v2455, %v2456
        %v2458 = vsel %vm746, %v2371, 0.0
        %v2459 = vadd.f32 %v2457, %v2458
        %v2460 = vsel %vm746, %v2444, 0.0
        %v2461 = vadd.f32 %v2459, %v2460
        %v2462 = vld [vmem:[%s6] sm:$0x1]
        %v2464 = vlaneseq
        %v2465 = vshrl.u32 %v2464, 7
        %v2466 = vsub.s32 0, %v2465
        %v2467 = vrot.slane %v2462, %v2466
        %v2469 = vadd.f32 %v2461, %v2467
        %2470 = vst.msk [vmem:[%s304] sm:$0xff] %vm746, %v2469
        %s2471 = sand.u32 %s202, 1
        %s2472 = scalar_lea.sflag [#allocation6], %s2471
        %s2473 = sand.u32 %s202, 1
        %s2474 = smul.addr %s2473, 8
        %s2475 = scalar_lea.vmem [#allocation5], %s2474
        // Predicated region
        $region53: #{tpu_custom_call.1} parent=47 // pred_check
          %p2476 = pneg %p212
        $region54: #{tpu_custom_call.1} parent=47 // pred_check_branch
          %2478 = sbr.rel (%p2476) target = $region56
        $region55: #{tpu_custom_call.1} parent=47 // pred_region
          %s2480 = ssub.s32 128, 128
          %2481 = vsyncadd %s2472, %s2480
          %s2482 = sadd.s32 %s26, %s25
          %s2483 = smul.addr %s2482, 128
          %s2484 = scalar_lea.hbm %s7, %s2483
          %s2486 = sshll.u32 %s2475, 4
          %s2487 = int_to_ptr.vmem [resolvable:$true] %s2486
          %2489 = dma.vmem_to_hbm [thread:$0]  %s2487, 128, %s2484, %s2472
        $region56: #{tpu_custom_call.1} parent=47 // pred_fallthru
          _
      $region48: #{tpu_custom_call.1} parent=5 // pred_fallthru
        _
      %p2490 = scmp.le.s32.totalorder 2, %s16
      // Predicated region
      $region57: #{tpu_custom_call.1} parent=5 // pred_check
        %p2491 = pneg %p2490
      $region58: #{tpu_custom_call.1} parent=5 // pred_check_branch
        %2493 = sbr.rel (%p2491) target = $region60
      $region59: #{tpu_custom_call.1} parent=5 // pred_region
        %s2494 = ssub.s32 %s16, 2
        // Predicated region
        $region61: #{tpu_custom_call.1} parent=59 // pred_check
          %p2495 = pneg %p218
        $region62: #{tpu_custom_call.1} parent=59 // pred_check_branch
          %2497 = sbr.rel (%p2495) target = $region64
        $region63: #{tpu_custom_call.1} parent=59 // pred_region
          %s2498 = sand.u32 %s203, 1
          %s2499 = scalar_lea.sflag [#allocation6], %s2498
          %s2500 = sand.u32 %s203, 1
          %s2501 = smul.addr %s2500, 8
          %s2502 = scalar_lea.vmem [#allocation5], %s2501
          %2503 = dma.done %s2499, 128
        $region64: #{tpu_custom_call.1} parent=59 // pred_fallthru
          _
      $region60: #{tpu_custom_call.1} parent=5 // pred_fallthru
        _
    $region6: #{tpu_custom_call.1} parent=1 // loop_footer
      %s20 = sadd.s32 1, %s16
    $region7: #{tpu_custom_call.1} parent=1 // loop_footer_branch
      %15 = sbr.rel target = $region3
    $region8: #{tpu_custom_call.1} parent=1 // loop_exit
      _
    %2504 = vsyncpa [#allocation6], 1
    %s2505 = scalar_lea.sflag [#allocation6], 1
    %2506 = vsyncpa %s2505, 1

</llo_original>
